<compile_context>
chip_gen: v7x
topology: tpu7x:2x2x1
jax: 0.10.0
libtpu: 0.0.40
codegen_flags: <defaults>
</compile_context>

<pallas_src>
import numpy as np
import jax
import jax.numpy as jnp
from jax.experimental import pallas as pl
from jax.experimental.pallas import tpu as pltpu

# ----------------------------- dimensions ------------------------------------
T_DIM, Y_DIM, R_DIM, Z_DIM, H_DIM, PI_DIM = 3, 2, 32, 16, 32, 4
BATCH, N_CONTEXT, N_TARGET = 2, 8, 16

LANES = 64                              # packed lane width: [enc | lupi] side by side
IN_FEATS = T_DIM + Y_DIM + PI_DIM       # 9 meaningful input columns
IN_COLS = 16                            # padded input-slab width
N_TGT_ROWS = BATCH * N_TARGET           # 32 target rows (come first in the stacked set)
N_ALL = BATCH * (N_TARGET + N_CONTEXT)  # 48 encoder rows (target, then context)

# ------------------- packed parameter layout (static, 8-row-aligned blocks) ---
_W_LAYOUT = [
    ("enc1", 16),    # layer 1 of both encoders, input cols [x|y|pi|pad]
    ("enc2", 64),    # block-diag(enc_w2, lupi_w2)
    ("enc3", 64),    # block-diag(enc_w3, lupi_w3)
    ("agg", 8),      # constant per-(set,batch) mean-aggregation one-hot (lanes 0:48)
    ("reagg", 64),   # RepresentationAggregator, rows pre-reordered for [r | r_pi] lanes
    ("ms_wh", 64), ("ms_wms", 64),
    ("dec1", 16),    # decoder layer-1 x part (y/pi/pad input cols hit zero rows)
    ("dec1z", 16),   # decoder layer-1 z part
    ("dec2", 64), ("dec3", 64), ("decms", 64),
    ("zexp", 32),    # constant per-batch z expansion (lanes 0:2)
]
_W_OFF, _off = {}, 0
for _n, _r in _W_LAYOUT:
    _W_OFF[_n] = (_off, _r)
    _off += _r
_W_ROWS = _off                           # 600 rows x 64 lanes (~150 KB f32)

_B_LAYOUT = ["b1", "b2", "b3", "reagg_b", "ms_bh", "ms_bms",
             "dec_b1", "dec_b2", "dec_b3", "dec_bms"]
_B_IDX = {n: i for i, n in enumerate(_B_LAYOUT)}


# ----------------------------- fused Pallas kernel ----------------------------
def _neural_process_kernel(in_ref, eps_ref, w_ref, b_ref, out_ref):
    def w(name):
        o, r = _W_OFF[name]
        return w_ref[o:o + r, :]            # 8-row-aligned, full-lane-width block load

    def b(name):
        i = _B_IDX[name]
        return b_ref[i:i + 1, :]            # (1, 64), broadcasts over rows

    def dot(a, bb):
        return jnp.dot(a, bb, preferred_element_type=jnp.float32)

    xall = in_ref[...]                                   # (48, 16) = [x|y|pi|0]

    # --- Both encoders lane-packed: lanes 0:32 Encoder(x,y), lanes 32:64 LupiEncoder(x,pi)
    h = jnp.maximum(dot(xall, w("enc1")) + b("b1"), 0.0)
    h = jnp.maximum(dot(h, w("enc2")) + b("b2"), 0.0)
    r_i = dot(h, w("enc3")) + b("b3")                    # (48, 64) = [r_i | r_pi_i]

    # --- Mean aggregation per (set, batch) group via one-hot matmul --------------
    # rows of r: [tgt b0, tgt b1, ctx b0, ctx b1, 4 zero pad rows]
    r = dot(w("agg")[:, :N_ALL], r_i)                    # (8, 64) = [r | r_pi]

    # --- RepresentationAggregator: ReLU(Linear(concat([r_pi, r]))) as ONE matmul --
    r = jnp.maximum(dot(r, w("reagg")) + b("reagg_b"), 0.0)     # lanes 0:32 meaningful

    # --- MuSigmaEncoder; mu/sigma heads lane-packed, lane-masked sigma transform --
    h = jnp.maximum(dot(r, w("ms_wh")) + b("ms_bh"), 0.0)
    ms = dot(h, w("ms_wms")) + b("ms_bms")               # lanes [0:Z)=mu_pre, [Z:2Z)=sigma_pre
    lane = jax.lax.broadcasted_iota(jnp.int32, ms.shape, 1)
    lat = jnp.where(lane < Z_DIM, ms, 0.1 + 0.9 * jax.nn.sigmoid(ms))   # (8, 64)

    # --- z = q_target.rsample() = mu_t + sigma_t * eps (target rows are 0:BATCH) --
    z = lat[0:BATCH, 0:Z_DIM] + lat[0:BATCH, Z_DIM:2 * Z_DIM] * eps_ref[...]   # (B, Z)

    # --- Decoder over target rows; z broadcast per batch via tiny expansion matmul
    zh = dot(w("zexp")[:, 0:BATCH], dot(z, w("dec1z")))  # (32, 64), no z_rep materialization
    xt = in_ref[0:N_TGT_ROWS, :]                         # (32, 16), aligned row window
    h = jnp.maximum(dot(xt, w("dec1")) + zh + b("dec_b1"), 0.0)
    h = jnp.maximum(dot(h, w("dec2")) + b("dec_b2"), 0.0)
    h = jnp.maximum(dot(h, w("dec3")) + b("dec_b3"), 0.0)
    ysl = dot(h, w("decms")) + b("dec_bms")              # lanes [0:Y)=mu_pre, [Y:2Y)=sigma_pre
    lane2 = jax.lax.broadcasted_iota(jnp.int32, ysl.shape, 1)
    dec = jnp.where(lane2 < Y_DIM, ysl, 0.1 + 0.9 * jax.nn.softplus(ysl))   # (32, 64)

    # --- single packed output slab: rows 0:8 latent (tgt, ctx), rows 8:40 decoder --
    out_ref[...] = jnp.concatenate([lat, dec], axis=0)   # one full store / one DMA


# ----------------------------- wrapper -----------------------------------------
@jax.jit
def neural_process_forward(w_all, b_all, x_context, y_context, x_target, y_target,
                           pi_context, pi_target, eps):
    """Training-mode forward: returns (p_y_pred, q_target, q_context) as (mu, sigma)."""
    B = x_target.shape[0]
    tgt = jnp.concatenate([x_target, y_target, pi_target], axis=-1).reshape(B * N_TARGET, IN_FEATS)
    ctx = jnp.concatenate([x_context, y_context, pi_context], axis=-1).reshape(B * N_CONTEXT, IN_FEATS)
    in_slab = jnp.pad(jnp.concatenate([tgt, ctx], axis=0), ((0, 0), (0, IN_COLS - IN_FEATS)))

    vmem = pl.BlockSpec(memory_space=pltpu.MemorySpace.VMEM)
    out = pl.pallas_call(
        _neural_process_kernel,
        out_shape=jax.ShapeDtypeStruct((8 + B * N_TARGET, LANES), jnp.float32),
        in_specs=[vmem, vmem, vmem, vmem],
        out_specs=vmem,
        cost_estimate=pl.CostEstimate(flops=2_000_000, transcendentals=5_000,
                                      bytes_accessed=170_000),
    )(in_slab, eps, w_all, b_all)

    mu_t, sigma_t = out[0:BATCH, 0:Z_DIM], out[0:BATCH, Z_DIM:2 * Z_DIM]
    mu_c, sigma_c = out[BATCH:2 * BATCH, 0:Z_DIM], out[BATCH:2 * BATCH, Z_DIM:2 * Z_DIM]
    dec = out[8:8 + B * N_TARGET, :]
    y_mu = dec[:, 0:Y_DIM].reshape(B, N_TARGET, Y_DIM)
    y_sigma = dec[:, Y_DIM:2 * Y_DIM].reshape(B, N_TARGET, Y_DIM)
    return (y_mu, y_sigma), (mu_t, sigma_t), (mu_c, sigma_c)


# ----------------------------- parameter init + packing -------------------------
def init_packed_params(key):
    keys = iter(jax.random.split(key, 16))

    def lin(fan_in, fan_out):
        """PyTorch nn.Linear default init: U(-1/sqrt(fan_in), ...); W stored (in, out)."""
        bound = 1.0 / float(np.sqrt(fan_in))
        kw, kb = jax.random.split(next(keys))
        wv = jax.random.uniform(kw, (fan_in, fan_out), jnp.float32, -bound, bound)
        bv = jax.random.uniform(kb, (fan_out,), jnp.float32, -bound, bound)
        return np.asarray(wv), np.asarray(bv)

    W = {n: np.zeros((r, LANES), np.float32) for n, r in _W_LAYOUT}
    b_slab = np.zeros((len(_B_LAYOUT), LANES), np.float32)
    bi = _B_IDX

    # --- Encoder (xy_to_r) and LupiEncoder (lupi_to_r), lane-packed [enc | lupi] ---
    w1, b1 = lin(T_DIM + Y_DIM, H_DIM); w2, b2 = lin(H_DIM, H_DIM); w3, b3 = lin(H_DIM, R_DIM)
    l1, c1 = lin(T_DIM + PI_DIM, H_DIM); l2, c2 = lin(H_DIM, H_DIM); l3, c3 = lin(H_DIM, R_DIM)
    W["enc1"][0:T_DIM, 0:H_DIM] = w1[0:T_DIM]                 # x -> enc
    W["enc1"][T_DIM:T_DIM + Y_DIM, 0:H_DIM] = w1[T_DIM:]      # y -> enc
    W["enc1"][0:T_DIM, H_DIM:2 * H_DIM] = l1[0:T_DIM]         # x -> lupi
    W["enc1"][T_DIM + Y_DIM:IN_FEATS, H_DIM:2 * H_DIM] = l1[T_DIM:]   # pi -> lupi
    b_slab[bi["b1"], 0:H_DIM] = b1; b_slab[bi["b1"], H_DIM:2 * H_DIM] = c1
    W["enc2"][0:H_DIM, 0:H_DIM] = w2; W["enc2"][H_DIM:2 * H_DIM, H_DIM:2 * H_DIM] = l2
    b_slab[bi["b2"], 0:H_DIM] = b2; b_slab[bi["b2"], H_DIM:2 * H_DIM] = c2
    W["enc3"][0:H_DIM, 0:R_DIM] = w3; W["enc3"][H_DIM:2 * H_DIM, R_DIM:2 * R_DIM] = l3
    b_slab[bi["b3"], 0:R_DIM] = b3; b_slab[bi["b3"], R_DIM:2 * R_DIM] = c3

    # --- RepresentationAggregator: Linear(2r, r)+ReLU on concat([r_pi, r]) (assumed) ---
    wa, ba = lin(2 * R_DIM, R_DIM)
    W["reagg"][0:R_DIM, 0:R_DIM] = wa[R_DIM:2 * R_DIM]        # multiplies r (lanes 0:32)
    W["reagg"][R_DIM:2 * R_DIM, 0:R_DIM] = wa[0:R_DIM]        # multiplies r_pi (lanes 32:64)
    b_slab[bi["reagg_b"], 0:R_DIM] = ba

    # --- MuSigmaEncoder --------------------------------------------------------
    wh, bh = lin(R_DIM, R_DIM); wm, bm = lin(R_DIM, Z_DIM); ws, bs = lin(R_DIM, Z_DIM)
    W["ms_wh"][0:R_DIM, 0:R_DIM] = wh
    b_slab[bi["ms_bh"], 0:R_DIM] = bh
    W["ms_wms"][0:R_DIM, 0:Z_DIM] = wm; W["ms_wms"][0:R_DIM, Z_DIM:2 * Z_DIM] = ws
    b_slab[bi["ms_bms"], 0:Z_DIM] = bm; b_slab[bi["ms_bms"], Z_DIM:2 * Z_DIM] = bs

    # --- Decoder (xz_to_y) ------------------------------------------------------
    d1, e1 = lin(T_DIM + Z_DIM, H_DIM); d2, e2 = lin(H_DIM, H_DIM); d3, e3 = lin(H_DIM, H_DIM)
    dm, em = lin(H_DIM, Y_DIM); dsg, esg = lin(H_DIM, Y_DIM)
    W["dec1"][0:T_DIM, 0:H_DIM] = d1[0:T_DIM]                 # x part (other input cols hit 0 rows)
    W["dec1z"][0:Z_DIM, 0:H_DIM] = d1[T_DIM:]                 # z part
    b_slab[bi["dec_b1"], 0:H_DIM] = e1
    W["dec2"][0:H_DIM, 0:H_DIM] = d2; b_slab[bi["dec_b2"], 0:H_DIM] = e2
    W["dec3"][0:H_DIM, 0:H_DIM] = d3; b_slab[bi["dec_b3"], 0:H_DIM] = e3
    W["decms"][0:H_DIM, 0:Y_DIM] = dm; W["decms"][0:H_DIM, Y_DIM:2 * Y_DIM] = dsg
    b_slab[bi["dec_bms"], 0:Y_DIM] = em; b_slab[bi["dec_bms"], Y_DIM:2 * Y_DIM] = esg

    # --- constants baked into the weight slab ------------------------------------
    for bb in range(BATCH):      # mean over each batch's target / context rows
        W["agg"][bb, bb * N_TARGET:(bb + 1) * N_TARGET] = 1.0 / N_TARGET
        W["agg"][BATCH + bb, N_TGT_ROWS + bb * N_CONTEXT:
                             N_TGT_ROWS + (bb + 1) * N_CONTEXT] = 1.0 / N_CONTEXT
    W["zexp"][:, 0:BATCH] = np.kron(np.eye(BATCH, dtype=np.float32),
                                    np.ones((N_TARGET, 1), np.float32))

    w_all = jnp.asarray(np.concatenate([W[n] for n, _ in _W_LAYOUT], axis=0))
    assert w_all.shape == (_W_ROWS, LANES)
    return w_all, jnp.asarray(b_slab)


# ----------------------------- main ---------------------------------------------
if __name__ == "__main__":
    key = jax.random.PRNGKey(0)
    k_param, k_x, k_y, k_pi, k_eps = jax.random.split(key, 5)

    w_all, b_all = init_packed_params(k_param)

    x_target = jax.random.normal(k_x, (BATCH, N_TARGET, T_DIM), jnp.float32)
    y_target = jax.random.normal(k_y, (BATCH, N_TARGET, Y_DIM), jnp.float32)
    pi_target = jax.random.normal(k_pi, (BATCH, N_TARGET, PI_DIM), jnp.float32)
    # context is a subset of target (per the docstring convention)
    x_context = x_target[:, :N_CONTEXT, :]
    y_context = y_target[:, :N_CONTEXT, :]
    pi_context = pi_target[:, :N_CONTEXT, :]
    # deterministic standard-normal noise used for q_target.rsample()
    eps = jax.random.normal(k_eps, (BATCH, Z_DIM), jnp.float32)

    (y_mu, y_sigma), (mu_t, sig_t), (mu_c, sig_c) = neural_process_forward(
        w_all, b_all, x_context, y_context, x_target, y_target,
        pi_context, pi_target, eps)

    jax.block_until_ready((y_mu, y_sigma, mu_t, sig_t, mu_c, sig_c))

    assert y_mu.shape == (BATCH, N_TARGET, Y_DIM)
    assert y_sigma.shape == (BATCH, N_TARGET, Y_DIM)
    assert mu_t.shape == (BATCH, Z_DIM) and sig_t.shape == (BATCH, Z_DIM)
    assert mu_c.shape == (BATCH, Z_DIM) and sig_c.shape == (BATCH, Z_DIM)
    assert bool(jnp.all(y_sigma > 0.0)) and bool(jnp.all(sig_t > 0.0)) and bool(jnp.all(sig_c > 0.0))
    assert bool(jnp.all(jnp.isfinite(y_mu))) and bool(jnp.all(jnp.isfinite(mu_t)))
    print("KERNEL_OK")
</pallas_src>

<mosaic_0001>
module attributes {stable_mosaic.version = 11 : i64} {
  func.func @_neural_process_kernel(%arg0: memref<48x16xf32, #tpu.memory_space<vmem>>, %arg1: memref<2x16xf32, #tpu.memory_space<vmem>>, %arg2: memref<600x64xf32, #tpu.memory_space<vmem>>, %arg3: memref<10x64xf32, #tpu.memory_space<vmem>>, %arg4: memref<40x64xf32, #tpu.memory_space<vmem>>) attributes {dimension_semantics = [], scalar_prefetch = 0 : i64, scratch_operands = 0 : i64, tpu.core_type = #tpu.core_type<tc>} {
    %c0 = arith.constant 0 : index
    %c0_0 = arith.constant 0 : index
    %0 = vector.load %arg0[%c0, %c0_0] : memref<48x16xf32, #tpu.memory_space<vmem>>, vector<48x16xf32>
    %c0_1 = arith.constant 0 : index
    %c0_2 = arith.constant 0 : index
    %1 = vector.load %arg2[%c0_1, %c0_2] : memref<600x64xf32, #tpu.memory_space<vmem>>, vector<16x64xf32>
    %cst = arith.constant dense<0.000000e+00> : vector<48x64xf32>
    %2 = tpu.matmul %0, %1, %cst {dimension_numbers = #tpu.dot_dimension_numbers<[1], [0], [0], [1], [0, 0, 1, 1], [], []>} : vector<48x16xf32>, vector<16x64xf32>, vector<48x64xf32> -> vector<48x64xf32>
    %c0_3 = arith.constant 0 : index
    %c0_4 = arith.constant 0 : index
    %3 = vector.load %arg3[%c0_3, %c0_4] : memref<10x64xf32, #tpu.memory_space<vmem>>, vector<1x64xf32>
    %4 = vector.broadcast %3 : vector<1x64xf32> to vector<48x64xf32>
    %5 = arith.addf %2, %4 : vector<48x64xf32>
    %cst_5 = arith.constant 0.000000e+00 : f32
    %6 = vector.broadcast %cst_5 : f32 to vector<48x64xf32>
    %7 = arith.maximumf %5, %6 : vector<48x64xf32>
    %c16 = arith.constant 16 : index
    %c0_6 = arith.constant 0 : index
    %8 = vector.load %arg2[%c16, %c0_6] : memref<600x64xf32, #tpu.memory_space<vmem>>, vector<64x64xf32>
    %cst_7 = arith.constant dense<0.000000e+00> : vector<48x64xf32>
    %9 = tpu.matmul %7, %8, %cst_7 {dimension_numbers = #tpu.dot_dimension_numbers<[1], [0], [0], [1], [0, 0, 1, 1], [], []>} : vector<48x64xf32>, vector<64x64xf32>, vector<48x64xf32> -> vector<48x64xf32>
    %c1 = arith.constant 1 : index
    %c0_8 = arith.constant 0 : index
    %10 = vector.load %arg3[%c1, %c0_8] : memref<10x64xf32, #tpu.memory_space<vmem>>, vector<1x64xf32>
    %11 = vector.broadcast %10 : vector<1x64xf32> to vector<48x64xf32>
    %12 = arith.addf %9, %11 : vector<48x64xf32>
    %cst_9 = arith.constant 0.000000e+00 : f32
    %13 = vector.broadcast %cst_9 : f32 to vector<48x64xf32>
    %14 = arith.maximumf %12, %13 : vector<48x64xf32>
    %c80 = arith.constant 80 : index
    %c0_10 = arith.constant 0 : index
    %15 = vector.load %arg2[%c80, %c0_10] : memref<600x64xf32, #tpu.memory_space<vmem>>, vector<64x64xf32>
    %cst_11 = arith.constant dense<0.000000e+00> : vector<48x64xf32>
    %16 = tpu.matmul %14, %15, %cst_11 {dimension_numbers = #tpu.dot_dimension_numbers<[1], [0], [0], [1], [0, 0, 1, 1], [], []>} : vector<48x64xf32>, vector<64x64xf32>, vector<48x64xf32> -> vector<48x64xf32>
    %c2 = arith.constant 2 : index
    %c0_12 = arith.constant 0 : index
    %17 = vector.load %arg3[%c2, %c0_12] : memref<10x64xf32, #tpu.memory_space<vmem>>, vector<1x64xf32>
    %18 = vector.broadcast %17 : vector<1x64xf32> to vector<48x64xf32>
    %19 = arith.addf %16, %18 : vector<48x64xf32>
    %c144 = arith.constant 144 : index
    %c0_13 = arith.constant 0 : index
    %20 = vector.load %arg2[%c144, %c0_13] : memref<600x64xf32, #tpu.memory_space<vmem>>, vector<8x64xf32>
    %21 = vector.extract_strided_slice %20 {offsets = [0, 0], sizes = [8, 48], strides = [1, 1]} : vector<8x64xf32> to vector<8x48xf32>
    %cst_14 = arith.constant dense<0.000000e+00> : vector<8x64xf32>
    %22 = tpu.matmul %21, %19, %cst_14 {dimension_numbers = #tpu.dot_dimension_numbers<[1], [0], [0], [1], [0, 0, 1, 1], [], []>} : vector<8x48xf32>, vector<48x64xf32>, vector<8x64xf32> -> vector<8x64xf32>
    %c152 = arith.constant 152 : index
    %c0_15 = arith.constant 0 : index
    %23 = vector.load %arg2[%c152, %c0_15] : memref<600x64xf32, #tpu.memory_space<vmem>>, vector<64x64xf32>
    %cst_16 = arith.constant dense<0.000000e+00> : vector<8x64xf32>
    %24 = tpu.matmul %22, %23, %cst_16 {dimension_numbers = #tpu.dot_dimension_numbers<[1], [0], [0], [1], [0, 0, 1, 1], [], []>} : vector<8x64xf32>, vector<64x64xf32>, vector<8x64xf32> -> vector<8x64xf32>
    %c3 = arith.constant 3 : index
    %c0_17 = arith.constant 0 : index
    %25 = vector.load %arg3[%c3, %c0_17] : memref<10x64xf32, #tpu.memory_space<vmem>>, vector<1x64xf32>
    %26 = vector.broadcast %25 : vector<1x64xf32> to vector<8x64xf32>
    %27 = arith.addf %24, %26 : vector<8x64xf32>
    %cst_18 = arith.constant 0.000000e+00 : f32
    %28 = vector.broadcast %cst_18 : f32 to vector<8x64xf32>
    %29 = arith.maximumf %27, %28 : vector<8x64xf32>
    %c216 = arith.constant 216 : index
    %c0_19 = arith.constant 0 : index
    %30 = vector.load %arg2[%c216, %c0_19] : memref<600x64xf32, #tpu.memory_space<vmem>>, vector<64x64xf32>
    %cst_20 = arith.constant dense<0.000000e+00> : vector<8x64xf32>
    %31 = tpu.matmul %29, %30, %cst_20 {dimension_numbers = #tpu.dot_dimension_numbers<[1], [0], [0], [1], [0, 0, 1, 1], [], []>} : vector<8x64xf32>, vector<64x64xf32>, vector<8x64xf32> -> vector<8x64xf32>
    %c4 = arith.constant 4 : index
    %c0_21 = arith.constant 0 : index
    %32 = vector.load %arg3[%c4, %c0_21] : memref<10x64xf32, #tpu.memory_space<vmem>>, vector<1x64xf32>
    %33 = vector.broadcast %32 : vector<1x64xf32> to vector<8x64xf32>
    %34 = arith.addf %31, %33 : vector<8x64xf32>
    %cst_22 = arith.constant 0.000000e+00 : f32
    %35 = vector.broadcast %cst_22 : f32 to vector<8x64xf32>
    %36 = arith.maximumf %34, %35 : vector<8x64xf32>
    %c280 = arith.constant 280 : index
    %c0_23 = arith.constant 0 : index
    %37 = vector.load %arg2[%c280, %c0_23] : memref<600x64xf32, #tpu.memory_space<vmem>>, vector<64x64xf32>
    %cst_24 = arith.constant dense<0.000000e+00> : vector<8x64xf32>
    %38 = tpu.matmul %36, %37, %cst_24 {dimension_numbers = #tpu.dot_dimension_numbers<[1], [0], [0], [1], [0, 0, 1, 1], [], []>} : vector<8x64xf32>, vector<64x64xf32>, vector<8x64xf32> -> vector<8x64xf32>
    %c5 = arith.constant 5 : index
    %c0_25 = arith.constant 0 : index
    %39 = vector.load %arg3[%c5, %c0_25] : memref<10x64xf32, #tpu.memory_space<vmem>>, vector<1x64xf32>
    %40 = vector.broadcast %39 : vector<1x64xf32> to vector<8x64xf32>
    %41 = arith.addf %38, %40 : vector<8x64xf32>
    %42 = tpu.iota {dimensions = array<i32: 1>} : vector<8x64xi32>
    %c16_i32 = arith.constant 16 : i32
    %43 = vector.broadcast %c16_i32 : i32 to vector<8x64xi32>
    %44 = arith.cmpi slt, %42, %43 : vector<8x64xi32>
    %45 = arith.negf %41 : vector<8x64xf32>
    %46 = math.exp %45 : vector<8x64xf32>
    %cst_26 = arith.constant 1.000000e+00 : f32
    %47 = vector.broadcast %cst_26 : f32 to vector<8x64xf32>
    %48 = arith.addf %47, %46 : vector<8x64xf32>
    %49 = arith.divf %47, %48 : vector<8x64xf32>
    %cst_27 = arith.constant 0.899999976 : f32
    %50 = vector.broadcast %cst_27 : f32 to vector<8x64xf32>
    %51 = arith.mulf %50, %49 : vector<8x64xf32>
    %cst_28 = arith.constant 1.000000e-01 : f32
    %52 = vector.broadcast %cst_28 : f32 to vector<8x64xf32>
    %53 = arith.addf %52, %51 : vector<8x64xf32>
    %54 = arith.select %44, %41, %53 : vector<8x64xi1>, vector<8x64xf32>
    %55 = vector.extract_strided_slice %54 {offsets = [0, 0], sizes = [2, 16], strides = [1, 1]} : vector<8x64xf32> to vector<2x16xf32>
    %56 = vector.extract_strided_slice %54 {offsets = [0, 16], sizes = [2, 16], strides = [1, 1]} : vector<8x64xf32> to vector<2x16xf32>
    %c0_29 = arith.constant 0 : index
    %c0_30 = arith.constant 0 : index
    %57 = vector.load %arg1[%c0_29, %c0_30] : memref<2x16xf32, #tpu.memory_space<vmem>>, vector<2x16xf32>
    %58 = arith.mulf %56, %57 : vector<2x16xf32>
    %59 = arith.addf %55, %58 : vector<2x16xf32>
    %c568 = arith.constant 568 : index
    %c0_31 = arith.constant 0 : index
    %60 = vector.load %arg2[%c568, %c0_31] : memref<600x64xf32, #tpu.memory_space<vmem>>, vector<32x64xf32>
    %61 = vector.extract_strided_slice %60 {offsets = [0, 0], sizes = [32, 2], strides = [1, 1]} : vector<32x64xf32> to vector<32x2xf32>
    %c360 = arith.constant 360 : index
    %c0_32 = arith.constant 0 : index
    %62 = vector.load %arg2[%c360, %c0_32] : memref<600x64xf32, #tpu.memory_space<vmem>>, vector<16x64xf32>
    %cst_33 = arith.constant dense<0.000000e+00> : vector<2x64xf32>
    %63 = tpu.matmul %59, %62, %cst_33 {dimension_numbers = #tpu.dot_dimension_numbers<[1], [0], [0], [1], [0, 0, 1, 1], [], []>} : vector<2x16xf32>, vector<16x64xf32>, vector<2x64xf32> -> vector<2x64xf32>
    %cst_34 = arith.constant dense<0.000000e+00> : vector<32x64xf32>
    %64 = tpu.matmul %61, %63, %cst_34 {dimension_numbers = #tpu.dot_dimension_numbers<[1], [0], [0], [1], [0, 0, 1, 1], [], []>} : vector<32x2xf32>, vector<2x64xf32>, vector<32x64xf32> -> vector<32x64xf32>
    %c0_35 = arith.constant 0 : index
    %c0_36 = arith.constant 0 : index
    %65 = vector.load %arg0[%c0_35, %c0_36] : memref<48x16xf32, #tpu.memory_space<vmem>>, vector<32x16xf32>
    %c344 = arith.constant 344 : index
    %c0_37 = arith.constant 0 : index
    %66 = vector.load %arg2[%c344, %c0_37] : memref<600x64xf32, #tpu.memory_space<vmem>>, vector<16x64xf32>
    %cst_38 = arith.constant dense<0.000000e+00> : vector<32x64xf32>
    %67 = tpu.matmul %65, %66, %cst_38 {dimension_numbers = #tpu.dot_dimension_numbers<[1], [0], [0], [1], [0, 0, 1, 1], [], []>} : vector<32x16xf32>, vector<16x64xf32>, vector<32x64xf32> -> vector<32x64xf32>
    %68 = arith.addf %67, %64 : vector<32x64xf32>
    %c6 = arith.constant 6 : index
    %c0_39 = arith.constant 0 : index
    %69 = vector.load %arg3[%c6, %c0_39] : memref<10x64xf32, #tpu.memory_space<vmem>>, vector<1x64xf32>
    %70 = vector.broadcast %69 : vector<1x64xf32> to vector<32x64xf32>
    %71 = arith.addf %68, %70 : vector<32x64xf32>
    %cst_40 = arith.constant 0.000000e+00 : f32
    %72 = vector.broadcast %cst_40 : f32 to vector<32x64xf32>
    %73 = arith.maximumf %71, %72 : vector<32x64xf32>
    %c376 = arith.constant 376 : index
    %c0_41 = arith.constant 0 : index
    %74 = vector.load %arg2[%c376, %c0_41] : memref<600x64xf32, #tpu.memory_space<vmem>>, vector<64x64xf32>
    %cst_42 = arith.constant dense<0.000000e+00> : vector<32x64xf32>
    %75 = tpu.matmul %73, %74, %cst_42 {dimension_numbers = #tpu.dot_dimension_numbers<[1], [0], [0], [1], [0, 0, 1, 1], [], []>} : vector<32x64xf32>, vector<64x64xf32>, vector<32x64xf32> -> vector<32x64xf32>
    %c7 = arith.constant 7 : index
    %c0_43 = arith.constant 0 : index
    %76 = vector.load %arg3[%c7, %c0_43] : memref<10x64xf32, #tpu.memory_space<vmem>>, vector<1x64xf32>
    %77 = vector.broadcast %76 : vector<1x64xf32> to vector<32x64xf32>
    %78 = arith.addf %75, %77 : vector<32x64xf32>
    %cst_44 = arith.constant 0.000000e+00 : f32
    %79 = vector.broadcast %cst_44 : f32 to vector<32x64xf32>
    %80 = arith.maximumf %78, %79 : vector<32x64xf32>
    %c440 = arith.constant 440 : index
    %c0_45 = arith.constant 0 : index
    %81 = vector.load %arg2[%c440, %c0_45] : memref<600x64xf32, #tpu.memory_space<vmem>>, vector<64x64xf32>
    %cst_46 = arith.constant dense<0.000000e+00> : vector<32x64xf32>
    %82 = tpu.matmul %80, %81, %cst_46 {dimension_numbers = #tpu.dot_dimension_numbers<[1], [0], [0], [1], [0, 0, 1, 1], [], []>} : vector<32x64xf32>, vector<64x64xf32>, vector<32x64xf32> -> vector<32x64xf32>
    %c8 = arith.constant 8 : index
    %c0_47 = arith.constant 0 : index
    %83 = vector.load %arg3[%c8, %c0_47] : memref<10x64xf32, #tpu.memory_space<vmem>>, vector<1x64xf32>
    %84 = vector.broadcast %83 : vector<1x64xf32> to vector<32x64xf32>
    %85 = arith.addf %82, %84 : vector<32x64xf32>
    %cst_48 = arith.constant 0.000000e+00 : f32
    %86 = vector.broadcast %cst_48 : f32 to vector<32x64xf32>
    %87 = arith.maximumf %85, %86 : vector<32x64xf32>
    %c504 = arith.constant 504 : index
    %c0_49 = arith.constant 0 : index
    %88 = vector.load %arg2[%c504, %c0_49] : memref<600x64xf32, #tpu.memory_space<vmem>>, vector<64x64xf32>
    %cst_50 = arith.constant dense<0.000000e+00> : vector<32x64xf32>
    %89 = tpu.matmul %87, %88, %cst_50 {dimension_numbers = #tpu.dot_dimension_numbers<[1], [0], [0], [1], [0, 0, 1, 1], [], []>} : vector<32x64xf32>, vector<64x64xf32>, vector<32x64xf32> -> vector<32x64xf32>
    %c9 = arith.constant 9 : index
    %c0_51 = arith.constant 0 : index
    %90 = vector.load %arg3[%c9, %c0_51] : memref<10x64xf32, #tpu.memory_space<vmem>>, vector<1x64xf32>
    %91 = vector.broadcast %90 : vector<1x64xf32> to vector<32x64xf32>
    %92 = arith.addf %89, %91 : vector<32x64xf32>
    %93 = tpu.iota {dimensions = array<i32: 1>} : vector<32x64xi32>
    %c2_i32 = arith.constant 2 : i32
    %94 = vector.broadcast %c2_i32 : i32 to vector<32x64xi32>
    %95 = arith.cmpi slt, %93, %94 : vector<32x64xi32>
    %cst_52 = arith.constant 0.000000e+00 : f32
    %96 = vector.broadcast %cst_52 : f32 to vector<32x64xf32>
    %97 = arith.maximumf %92, %96 : vector<32x64xf32>
    %98 = vector.broadcast %cst_52 : f32 to vector<32x64xf32>
    %99 = arith.subf %92, %98 : vector<32x64xf32>
    %100 = arith.cmpf one, %99, %99 : vector<32x64xf32>
    %101 = vector.broadcast %cst_52 : f32 to vector<32x64xf32>
    %102 = arith.addf %92, %101 : vector<32x64xf32>
    %103 = math.absf %99 : vector<32x64xf32>
    %cst_53 = arith.constant 0.000000e+00 : f32
    %104 = vector.broadcast %cst_53 : f32 to vector<32x64xf32>
    %105 = arith.subf %104, %103 : vector<32x64xf32>
    %106 = math.exp %105 : vector<32x64xf32>
    %107 = math.log1p %106 : vector<32x64xf32>
    %108 = arith.addf %97, %107 : vector<32x64xf32>
    %109 = arith.select %100, %102, %108 : vector<32x64xi1>, vector<32x64xf32>
    %cst_54 = arith.constant 0.899999976 : f32
    %110 = vector.broadcast %cst_54 : f32 to vector<32x64xf32>
    %111 = arith.mulf %110, %109 : vector<32x64xf32>
    %cst_55 = arith.constant 1.000000e-01 : f32
    %112 = vector.broadcast %cst_55 : f32 to vector<32x64xf32>
    %113 = arith.addf %112, %111 : vector<32x64xf32>
    %114 = arith.select %95, %92, %113 : vector<32x64xi1>, vector<32x64xf32>
    %115 = tpu.concatenate %54, %114 in 0 : vector<8x64xf32>, vector<32x64xf32> -> vector<40x64xf32>
    %c0_56 = arith.constant 0 : index
    %c0_57 = arith.constant 0 : index
    %116 = vector.load %arg4[%c0_56, %c0_57] : memref<40x64xf32, #tpu.memory_space<vmem>>, vector<40x64xf32>
    tpu.vector_store %arg4[%c0_56, %c0_57], %115 {strides = array<i32>} : memref<40x64xf32, #tpu.memory_space<vmem>>, vector<40x64xf32>,
    return
  }
}

</mosaic_0001>

<llo_original>
// kernel: neural_process_forward.1
$region0: #{neural_process_forward.1}
  #allocation0 [shape = 'u32[]', space=smem, size = 0x4, offset = 0x4, fixed_abs, tag = 'smem constant byte address 0x4 - core index']
  #allocation1 [shape = 'u32[144,128]{1,0:T(1,128)}', space=vmem, size = 0x12000, scoped, tag = 'internal scratch']
  %s0 = inlined_call_operand.vmem [shape: f32[48,16], index: 0, kind: input, shape index: {}]
  %s1 = inlined_call_operand.vmem [shape: f32[2,16], index: 1, kind: input, shape index: {}]
  %s2 = inlined_call_operand.vmem [shape: f32[600,64], index: 2, kind: input, shape index: {}]
  %s3 = inlined_call_operand.vmem [shape: f32[10,64], index: 3, kind: input, shape index: {}]
  %s4 = inlined_call_operand.vmem [shape: f32[40,64], index: 4, kind: output, shape index: {}]
  %s5 = sld [smem:[#allocation0]]
  $region26: #{neural_process_forward.1} parent=0
    _
  %s7 = ssub.s32 1, %s5
  %s8 = scalar_select 0, %s7, %s5
  // Predicated region
  $region2: #{neural_process_forward.1} parent=0 // pred_check
    _
  $region3: #{neural_process_forward.1} parent=0 // pred_check_branch
    %10 = sbr.rel (0) target = $region5
  $region4: #{neural_process_forward.1} parent=0 // pred_region
    _
  $region5: #{neural_process_forward.1} parent=0 // pred_fallthru
    _
  // Predicated region
  $region6: #{neural_process_forward.1} parent=0 // pred_check
    _
  $region7: #{neural_process_forward.1} parent=0 // pred_check_branch
    %12 = sbr.rel (0) target = $region9
  $region8: #{neural_process_forward.1} parent=0 // pred_region
    _
  $region9: #{neural_process_forward.1} parent=0 // pred_fallthru
    _
  // Predicated region
  $region10: #{neural_process_forward.1} parent=0 // pred_check
    _
  $region11: #{neural_process_forward.1} parent=0 // pred_check_branch
    %14 = sbr.rel (0) target = $region13
  $region12: #{neural_process_forward.1} parent=0 // pred_region
    _
  $region13: #{neural_process_forward.1} parent=0 // pred_fallthru
    _
  // Predicated region
  $region14: #{neural_process_forward.1} parent=0 // pred_check
    _
  $region15: #{neural_process_forward.1} parent=0 // pred_check_branch
    %16 = sbr.rel (0) target = $region17
  $region16: #{neural_process_forward.1} parent=0 // pred_region
    _
  $region17: #{neural_process_forward.1} parent=0 // pred_fallthru
    _
  %v17 = vld [vmem:[%s0] sm:$0xff]
  %v18 = vld [vmem:[%s0 + $0x8] sm:$0xff]
  %v19 = vld [vmem:[%s0 + $0x10] sm:$0xff]
  %v20 = vld [vmem:[%s0 + $0x18] sm:$0xff]
  %v21 = vld [vmem:[%s0 + $0x20] sm:$0xff]
  %v22 = vld [vmem:[%s0 + $0x28] sm:$0xff]
  %v23 = vld [vmem:[%s2] sm:$0xff]
  %v24 = vld [vmem:[%s2 + $0x8] sm:$0xff]
  %v25 = vld [vmem:[%s3] sm:$0x1]
  %v26 = vlaneseq
  %v27 = vshrl.u32 %v26, 7
  %v28 = vsub.s32 0, %v27
  %v29 = vrot.slane %v25, %v28
  %vm30 = vcmask 130048
  %v32 = vsel %vm30, %v17, 0
  %v35 = vsel %vm30, %v18, 0
  %v38 = vsel %vm30, %v19, 0
  %v41 = vsel %vm30, %v20, 0
  %v44 = vsel %vm30, %v21, 0
  %v47 = vsel %vm30, %v22, 0
  %49 = vmatprep.subr.mxu0 0.0
  %50 = vmatpush1.msra.mxu0 %v23
  %51 = vmatprep.subr.mxu0 0.0
  %52 = vmatpush1.msra.mxu0 %v24
  %53 = vmatprep.subr.mxu0 0.0
  %54 = vmatpush1.msra.mxu0 0.0
  %55 = vmatprep.subr.mxu0 0.0
  %56 = vmatpush1.msra.mxu0 0.0
  %57 = vmatprep.subr.mxu0 0.0
  %58 = vmatpush1.msra.mxu0 0.0
  %59 = vmatprep.subr.mxu0 0.0
  %60 = vmatpush1.msra.mxu0 0.0
  %61 = vmatprep.subr.mxu0 0.0
  %62 = vmatpush1.msra.mxu0 0.0
  %63 = vmatprep.subr.mxu0 0.0
  %64 = vmatpush1.msra.mxu0 0.0
  %65 = vmatprep.subr.mxu0 0.0
  %66 = vmatpush1.msra.mxu0 0.0
  %67 = vmatprep.subr.mxu0 0.0
  %68 = vmatpush1.msra.mxu0 0.0
  %69 = vmatprep.subr.mxu0 0.0
  %70 = vmatpush1.msra.mxu0 0.0
  %71 = vmatprep.subr.mxu0 0.0
  %72 = vmatpush1.msra.mxu0 0.0
  %73 = vmatprep.subr.mxu0 0.0
  %74 = vmatpush1.msra.mxu0 0.0
  %75 = vmatprep.subr.mxu0 0.0
  %76 = vmatpush1.msra.mxu0 0.0
  %77 = vmatprep.subr.mxu0 0.0
  %78 = vmatpush1.msra.mxu0 0.0
  %79 = vmatprep.subr.mxu0 0.0
  %80 = vmatpush1.msra.mxu0 0.0
  %81 = vmatprep.subr.mxu0 0.0
  %82 = vmatpush1.msra.mxu0 0.0
  %83 = vmatprep.subr.mxu0 0.0
  %84 = vmatpush1.msra.mxu0 0.0
  %85 = vmatprep.subr.mxu0 0.0
  %86 = vmatpush1.msra.mxu0 0.0
  %87 = vmatprep.subr.mxu0 0.0
  %88 = vmatpush1.msra.mxu0 0.0
  %89 = vmatprep.subr.mxu0 0.0
  %90 = vmatpush1.msra.mxu0 0.0
  %91 = vmatprep.subr.mxu0 0.0
  %92 = vmatpush1.msra.mxu0 0.0
  %93 = vmatprep.subr.mxu0 0.0
  %94 = vmatpush1.msra.mxu0 0.0
  %95 = vmatprep.subr.mxu0 0.0
  %96 = vmatpush1.msra.mxu0 0.0
  %97 = vmatprep.subr.mxu0 0.0
  %98 = vmatpush1.msra.mxu0 0.0
  %99 = vmatprep.subr.mxu0 0.0
  %100 = vmatpush1.msra.mxu0 0.0
  %101 = vmatprep.subr.mxu0 0.0
  %102 = vmatpush1.msra.mxu0 0.0
  %103 = vmatprep.subr.mxu0 0.0
  %104 = vmatpush1.msra.mxu0 0.0
  %105 = vmatprep.subr.mxu0 0.0
  %106 = vmatpush1.msra.mxu0 0.0
  %107 = vmatprep.subr.mxu0 0.0
  %108 = vmatpush1.msra.mxu0 0.0
  %109 = vmatprep.subr.mxu0 0.0
  %110 = vmatpush1.msra.mxu0 0.0
  %111 = vmatprep.subr.mxu0 0.0
  %112 = vmatpush1.msra.mxu0 0.0
  %113 = vmatprep.mubr.f32.mxu0 0.0
  %114 = vmatmul.mubr.f32.gmra.mrb[0].mxu0 %v32
  %v115 = vpop.f32.mrb[0].mxu0
  %v116 = vadd.f32 %v29, %v115
  %v117 = vpop.f32.mrb[0].mxu0
  %118 = vmatprep.mubr.f32.mxu0 0.0
  %119 = vmatmul.mubr.f32.gmra.mrb[0].mxu0 %v35
  %v120 = vpop.f32.mrb[0].mxu0
  %v121 = vadd.f32 %v29, %v120
  %v122 = vpop.f32.mrb[0].mxu0
  %123 = vmatprep.mubr.f32.mxu0 0.0
  %124 = vmatmul.mubr.f32.gmra.mrb[0].mxu0 %v38
  %v125 = vpop.f32.mrb[0].mxu0
  %v126 = vadd.f32 %v29, %v125
  %v127 = vpop.f32.mrb[0].mxu0
  %128 = vmatprep.mubr.f32.mxu0 0.0
  %129 = vmatmul.mubr.f32.gmra.mrb[0].mxu0 %v41
  %v130 = vpop.f32.mrb[0].mxu0
  %v131 = vadd.f32 %v29, %v130
  %v132 = vpop.f32.mrb[0].mxu0
  %133 = vmatprep.mubr.f32.mxu0 0.0
  %134 = vmatmul.mubr.f32.gmra.mrb[0].mxu0 %v44
  %v135 = vpop.f32.mrb[0].mxu0
  %v136 = vadd.f32 %v29, %v135
  %v137 = vpop.f32.mrb[0].mxu0
  %138 = vmatprep.mubr.f32.mxu0 0.0
  %139 = vmatmul.mubr.f32.gmra.mrb[0].mxu0 %v47
  %v140 = vpop.f32.mrb[0].mxu0
  %v141 = vadd.f32 %v29, %v140
  %v142 = vpop.f32.mrb[0].mxu0
  %143 = vdwg.mxu0
  %v144 = vmax.f32 %v116, 0.0
  %v145 = vmax.f32 %v121, 0.0
  %v146 = vmax.f32 %v126, 0.0
  %v147 = vmax.f32 %v131, 0.0
  %v148 = vmax.f32 %v136, 0.0
  %v149 = vmax.f32 %v141, 0.0
  %v150 = vld [vmem:[%s2 + $0x10] sm:$0xff]
  %v151 = vld [vmem:[%s2 + $0x18] sm:$0xff]
  %v152 = vld [vmem:[%s2 + $0x20] sm:$0xff]
  %v153 = vld [vmem:[%s2 + $0x28] sm:$0xff]
  %v154 = vld [vmem:[%s2 + $0x30] sm:$0xff]
  %v155 = vld [vmem:[%s2 + $0x38] sm:$0xff]
  %v156 = vld [vmem:[%s2 + $0x40] sm:$0xff]
  %v157 = vld [vmem:[%s2 + $0x48] sm:$0xff]
  %v158 = vld [vmem:[%s3 + $0x1] sm:$0x1]
  %v159 = vlaneseq
  %v160 = vshrl.u32 %v159, 7
  %v161 = vsub.s32 0, %v160
  %v162 = vrot.slane %v158, %v161
  %vm163 = vcmask 523264
  %v165 = vsel %vm163, %v144, 0
  %v168 = vsel %vm163, %v145, 0
  %v171 = vsel %vm163, %v146, 0
  %v174 = vsel %vm163, %v147, 0
  %v177 = vsel %vm163, %v148, 0
  %v180 = vsel %vm163, %v149, 0
  %182 = vmatprep.subr.mxu0 0.0
  %183 = vmatpush1.msra.mxu0 %v150
  %184 = vmatprep.subr.mxu0 0.0
  %185 = vmatpush1.msra.mxu0 %v151
  %186 = vmatprep.subr.mxu0 0.0
  %187 = vmatpush1.msra.mxu0 %v152
  %188 = vmatprep.subr.mxu0 0.0
  %189 = vmatpush1.msra.mxu0 %v153
  %190 = vmatprep.subr.mxu0 0.0
  %191 = vmatpush1.msra.mxu0 %v154
  %192 = vmatprep.subr.mxu0 0.0
  %193 = vmatpush1.msra.mxu0 %v155
  %194 = vmatprep.subr.mxu0 0.0
  %195 = vmatpush1.msra.mxu0 %v156
  %196 = vmatprep.subr.mxu0 0.0
  %197 = vmatpush1.msra.mxu0 %v157
  %198 = vmatprep.subr.mxu0 0.0
  %199 = vmatpush1.msra.mxu0 0.0
  %200 = vmatprep.subr.mxu0 0.0
  %201 = vmatpush1.msra.mxu0 0.0
  %202 = vmatprep.subr.mxu0 0.0
  %203 = vmatpush1.msra.mxu0 0.0
  %204 = vmatprep.subr.mxu0 0.0
  %205 = vmatpush1.msra.mxu0 0.0
  %206 = vmatprep.subr.mxu0 0.0
  %207 = vmatpush1.msra.mxu0 0.0
  %208 = vmatprep.subr.mxu0 0.0
  %209 = vmatpush1.msra.mxu0 0.0
  %210 = vmatprep.subr.mxu0 0.0
  %211 = vmatpush1.msra.mxu0 0.0
  %212 = vmatprep.subr.mxu0 0.0
  %213 = vmatpush1.msra.mxu0 0.0
  %214 = vmatprep.subr.mxu0 0.0
  %215 = vmatpush1.msra.mxu0 0.0
  %216 = vmatprep.subr.mxu0 0.0
  %217 = vmatpush1.msra.mxu0 0.0
  %218 = vmatprep.subr.mxu0 0.0
  %219 = vmatpush1.msra.mxu0 0.0
  %220 = vmatprep.subr.mxu0 0.0
  %221 = vmatpush1.msra.mxu0 0.0
  %222 = vmatprep.subr.mxu0 0.0
  %223 = vmatpush1.msra.mxu0 0.0
  %224 = vmatprep.subr.mxu0 0.0
  %225 = vmatpush1.msra.mxu0 0.0
  %226 = vmatprep.subr.mxu0 0.0
  %227 = vmatpush1.msra.mxu0 0.0
  %228 = vmatprep.subr.mxu0 0.0
  %229 = vmatpush1.msra.mxu0 0.0
  %230 = vmatprep.subr.mxu0 0.0
  %231 = vmatpush1.msra.mxu0 0.0
  %232 = vmatprep.subr.mxu0 0.0
  %233 = vmatpush1.msra.mxu0 0.0
  %234 = vmatprep.subr.mxu0 0.0
  %235 = vmatpush1.msra.mxu0 0.0
  %236 = vmatprep.subr.mxu0 0.0
  %237 = vmatpush1.msra.mxu0 0.0
  %238 = vmatprep.subr.mxu0 0.0
  %239 = vmatpush1.msra.mxu0 0.0
  %240 = vmatprep.subr.mxu0 0.0
  %241 = vmatpush1.msra.mxu0 0.0
  %242 = vmatprep.subr.mxu0 0.0
  %243 = vmatpush1.msra.mxu0 0.0
  %244 = vmatprep.subr.mxu0 0.0
  %245 = vmatpush1.msra.mxu0 0.0
  %246 = vmatprep.mubr.f32.mxu0 0.0
  %247 = vmatmul.mubr.f32.gmra.mrb[0].mxu0 %v165
  %v248 = vpop.f32.mrb[0].mxu0
  %v249 = vadd.f32 %v162, %v248
  %v250 = vpop.f32.mrb[0].mxu0
  %251 = vmatprep.mubr.f32.mxu0 0.0
  %252 = vmatmul.mubr.f32.gmra.mrb[0].mxu0 %v168
  %v253 = vpop.f32.mrb[0].mxu0
  %v254 = vadd.f32 %v162, %v253
  %v255 = vpop.f32.mrb[0].mxu0
  %256 = vmatprep.mubr.f32.mxu0 0.0
  %257 = vmatmul.mubr.f32.gmra.mrb[0].mxu0 %v171
  %v258 = vpop.f32.mrb[0].mxu0
  %v259 = vadd.f32 %v162, %v258
  %v260 = vpop.f32.mrb[0].mxu0
  %261 = vmatprep.mubr.f32.mxu0 0.0
  %262 = vmatmul.mubr.f32.gmra.mrb[0].mxu0 %v174
  %v263 = vpop.f32.mrb[0].mxu0
  %v264 = vadd.f32 %v162, %v263
  %v265 = vpop.f32.mrb[0].mxu0
  %266 = vmatprep.mubr.f32.mxu0 0.0
  %267 = vmatmul.mubr.f32.gmra.mrb[0].mxu0 %v177
  %v268 = vpop.f32.mrb[0].mxu0
  %v269 = vadd.f32 %v162, %v268
  %v270 = vpop.f32.mrb[0].mxu0
  %271 = vmatprep.mubr.f32.mxu0 0.0
  %272 = vmatmul.mubr.f32.gmra.mrb[0].mxu0 %v180
  %v273 = vpop.f32.mrb[0].mxu0
  %v274 = vadd.f32 %v162, %v273
  %v275 = vpop.f32.mrb[0].mxu0
  %276 = vdwg.mxu0
  %v277 = vmax.f32 %v249, 0.0
  %v278 = vmax.f32 %v254, 0.0
  %v279 = vmax.f32 %v259, 0.0
  %v280 = vmax.f32 %v264, 0.0
  %v281 = vmax.f32 %v269, 0.0
  %v282 = vmax.f32 %v274, 0.0
  %v283 = vld [vmem:[%s2 + $0x50] sm:$0xff]
  %v284 = vld [vmem:[%s2 + $0x58] sm:$0xff]
  %v285 = vld [vmem:[%s2 + $0x60] sm:$0xff]
  %v286 = vld [vmem:[%s2 + $0x68] sm:$0xff]
  %v287 = vld [vmem:[%s2 + $0x70] sm:$0xff]
  %v288 = vld [vmem:[%s2 + $0x78] sm:$0xff]
  %v289 = vld [vmem:[%s2 + $0x80] sm:$0xff]
  %v290 = vld [vmem:[%s2 + $0x88] sm:$0xff]
  %v291 = vld [vmem:[%s3 + $0x2] sm:$0x1]
  %v292 = vlaneseq
  %v293 = vshrl.u32 %v292, 7
  %v294 = vsub.s32 0, %v293
  %v295 = vrot.slane %v291, %v294
  %v297 = vsel %vm163, %v277, 0
  %v300 = vsel %vm163, %v278, 0
  %v303 = vsel %vm163, %v279, 0
  %v306 = vsel %vm163, %v280, 0
  %v309 = vsel %vm163, %v281, 0
  %v312 = vsel %vm163, %v282, 0
  %314 = vmatprep.subr.mxu0 0.0
  %315 = vmatpush1.msra.mxu0 %v283
  %316 = vmatprep.subr.mxu0 0.0
  %317 = vmatpush1.msra.mxu0 %v284
  %318 = vmatprep.subr.mxu0 0.0
  %319 = vmatpush1.msra.mxu0 %v285
  %320 = vmatprep.subr.mxu0 0.0
  %321 = vmatpush1.msra.mxu0 %v286
  %322 = vmatprep.subr.mxu0 0.0
  %323 = vmatpush1.msra.mxu0 %v287
  %324 = vmatprep.subr.mxu0 0.0
  %325 = vmatpush1.msra.mxu0 %v288
  %326 = vmatprep.subr.mxu0 0.0
  %327 = vmatpush1.msra.mxu0 %v289
  %328 = vmatprep.subr.mxu0 0.0
  %329 = vmatpush1.msra.mxu0 %v290
  %330 = vmatprep.subr.mxu0 0.0
  %331 = vmatpush1.msra.mxu0 0.0
  %332 = vmatprep.subr.mxu0 0.0
  %333 = vmatpush1.msra.mxu0 0.0
  %334 = vmatprep.subr.mxu0 0.0
  %335 = vmatpush1.msra.mxu0 0.0
  %336 = vmatprep.subr.mxu0 0.0
  %337 = vmatpush1.msra.mxu0 0.0
  %338 = vmatprep.subr.mxu0 0.0
  %339 = vmatpush1.msra.mxu0 0.0
  %340 = vmatprep.subr.mxu0 0.0
  %341 = vmatpush1.msra.mxu0 0.0
  %342 = vmatprep.subr.mxu0 0.0
  %343 = vmatpush1.msra.mxu0 0.0
  %344 = vmatprep.subr.mxu0 0.0
  %345 = vmatpush1.msra.mxu0 0.0
  %346 = vmatprep.subr.mxu0 0.0
  %347 = vmatpush1.msra.mxu0 0.0
  %348 = vmatprep.subr.mxu0 0.0
  %349 = vmatpush1.msra.mxu0 0.0
  %350 = vmatprep.subr.mxu0 0.0
  %351 = vmatpush1.msra.mxu0 0.0
  %352 = vmatprep.subr.mxu0 0.0
  %353 = vmatpush1.msra.mxu0 0.0
  %354 = vmatprep.subr.mxu0 0.0
  %355 = vmatpush1.msra.mxu0 0.0
  %356 = vmatprep.subr.mxu0 0.0
  %357 = vmatpush1.msra.mxu0 0.0
  %358 = vmatprep.subr.mxu0 0.0
  %359 = vmatpush1.msra.mxu0 0.0
  %360 = vmatprep.subr.mxu0 0.0
  %361 = vmatpush1.msra.mxu0 0.0
  %362 = vmatprep.subr.mxu0 0.0
  %363 = vmatpush1.msra.mxu0 0.0
  %364 = vmatprep.subr.mxu0 0.0
  %365 = vmatpush1.msra.mxu0 0.0
  %366 = vmatprep.subr.mxu0 0.0
  %367 = vmatpush1.msra.mxu0 0.0
  %368 = vmatprep.subr.mxu0 0.0
  %369 = vmatpush1.msra.mxu0 0.0
  %370 = vmatprep.subr.mxu0 0.0
  %371 = vmatpush1.msra.mxu0 0.0
  %372 = vmatprep.subr.mxu0 0.0
  %373 = vmatpush1.msra.mxu0 0.0
  %374 = vmatprep.subr.mxu0 0.0
  %375 = vmatpush1.msra.mxu0 0.0
  %376 = vmatprep.subr.mxu0 0.0
  %377 = vmatpush1.msra.mxu0 0.0
  %378 = vmatprep.mubr.f32.mxu0 0.0
  %379 = vmatmul.mubr.f32.gmra.mrb[0].mxu0 %v297
  %v380 = vpop.f32.mrb[0].mxu0
  %v381 = vadd.f32 %v295, %v380
  %v382 = vpop.f32.mrb[0].mxu0
  %383 = vmatprep.mubr.f32.mxu0 0.0
  %384 = vmatmul.mubr.f32.gmra.mrb[0].mxu0 %v300
  %v385 = vpop.f32.mrb[0].mxu0
  %v386 = vadd.f32 %v295, %v385
  %v387 = vpop.f32.mrb[0].mxu0
  %388 = vmatprep.mubr.f32.mxu0 0.0
  %389 = vmatmul.mubr.f32.gmra.mrb[0].mxu0 %v303
  %v390 = vpop.f32.mrb[0].mxu0
  %v391 = vadd.f32 %v295, %v390
  %v392 = vpop.f32.mrb[0].mxu0
  %393 = vmatprep.mubr.f32.mxu0 0.0
  %394 = vmatmul.mubr.f32.gmra.mrb[0].mxu0 %v306
  %v395 = vpop.f32.mrb[0].mxu0
  %v396 = vadd.f32 %v295, %v395
  %v397 = vpop.f32.mrb[0].mxu0
  %398 = vmatprep.mubr.f32.mxu0 0.0
  %399 = vmatmul.mubr.f32.gmra.mrb[0].mxu0 %v309
  %v400 = vpop.f32.mrb[0].mxu0
  %v401 = vadd.f32 %v295, %v400
  %v402 = vpop.f32.mrb[0].mxu0
  %403 = vmatprep.mubr.f32.mxu0 0.0
  %404 = vmatmul.mubr.f32.gmra.mrb[0].mxu0 %v312
  %v405 = vpop.f32.mrb[0].mxu0
  %v406 = vadd.f32 %v295, %v405
  %v407 = vpop.f32.mrb[0].mxu0
  %408 = vdwg.mxu0
  %v409 = vld [vmem:[%s2 + $0x90] sm:$0xff]
  %vm410 = vcmask 392192
  %v412 = vsel %vm410, %v409, 0
  %414 = vmatprep.subr.mxu0 0.0
  %415 = vmatpush1.msra.mxu0 %v381
  %416 = vmatprep.subr.mxu0 0.0
  %417 = vmatpush1.msra.mxu0 %v386
  %418 = vmatprep.subr.mxu0 0.0
  %419 = vmatpush1.msra.mxu0 %v391
  %420 = vmatprep.subr.mxu0 0.0
  %421 = vmatpush1.msra.mxu0 %v396
  %422 = vmatprep.subr.mxu0 0.0
  %423 = vmatpush1.msra.mxu0 %v401
  %424 = vmatprep.subr.mxu0 0.0
  %425 = vmatpush1.msra.mxu0 %v406
  %426 = vmatprep.subr.mxu0 0.0
  %427 = vmatpush1.msra.mxu0 0.0
  %428 = vmatprep.subr.mxu0 0.0
  %429 = vmatpush1.msra.mxu0 0.0
  %430 = vmatprep.subr.mxu0 0.0
  %431 = vmatpush1.msra.mxu0 0.0
  %432 = vmatprep.subr.mxu0 0.0
  %433 = vmatpush1.msra.mxu0 0.0
  %434 = vmatprep.subr.mxu0 0.0
  %435 = vmatpush1.msra.mxu0 0.0
  %436 = vmatprep.subr.mxu0 0.0
  %437 = vmatpush1.msra.mxu0 0.0
  %438 = vmatprep.subr.mxu0 0.0
  %439 = vmatpush1.msra.mxu0 0.0
  %440 = vmatprep.subr.mxu0 0.0
  %441 = vmatpush1.msra.mxu0 0.0
  %442 = vmatprep.subr.mxu0 0.0
  %443 = vmatpush1.msra.mxu0 0.0
  %444 = vmatprep.subr.mxu0 0.0
  %445 = vmatpush1.msra.mxu0 0.0
  %446 = vmatprep.subr.mxu0 0.0
  %447 = vmatpush1.msra.mxu0 0.0
  %448 = vmatprep.subr.mxu0 0.0
  %449 = vmatpush1.msra.mxu0 0.0
  %450 = vmatprep.subr.mxu0 0.0
  %451 = vmatpush1.msra.mxu0 0.0
  %452 = vmatprep.subr.mxu0 0.0
  %453 = vmatpush1.msra.mxu0 0.0
  %454 = vmatprep.subr.mxu0 0.0
  %455 = vmatpush1.msra.mxu0 0.0
  %456 = vmatprep.subr.mxu0 0.0
  %457 = vmatpush1.msra.mxu0 0.0
  %458 = vmatprep.subr.mxu0 0.0
  %459 = vmatpush1.msra.mxu0 0.0
  %460 = vmatprep.subr.mxu0 0.0
  %461 = vmatpush1.msra.mxu0 0.0
  %462 = vmatprep.subr.mxu0 0.0
  %463 = vmatpush1.msra.mxu0 0.0
  %464 = vmatprep.subr.mxu0 0.0
  %465 = vmatpush1.msra.mxu0 0.0
  %466 = vmatprep.subr.mxu0 0.0
  %467 = vmatpush1.msra.mxu0 0.0
  %468 = vmatprep.subr.mxu0 0.0
  %469 = vmatpush1.msra.mxu0 0.0
  %470 = vmatprep.subr.mxu0 0.0
  %471 = vmatpush1.msra.mxu0 0.0
  %472 = vmatprep.subr.mxu0 0.0
  %473 = vmatpush1.msra.mxu0 0.0
  %474 = vmatprep.subr.mxu0 0.0
  %475 = vmatpush1.msra.mxu0 0.0
  %476 = vmatprep.subr.mxu0 0.0
  %477 = vmatpush1.msra.mxu0 0.0
  %478 = vmatprep.mubr.f32.mxu0 0.0
  %479 = vmatmul.mubr.f32.gmra.mrb[0].mxu0 %v412
  %v480 = vpop.f32.mrb[0].mxu0
  %v481 = vadd.f32 0.0, %v480
  %v482 = vpop.f32.mrb[0].mxu0
  %483 = vdwg.mxu0
  %v484 = vld [vmem:[%s2 + $0x98] sm:$0xff]
  %v485 = vld [vmem:[%s2 + $0xa0] sm:$0xff]
  %v486 = vld [vmem:[%s2 + $0xa8] sm:$0xff]
  %v487 = vld [vmem:[%s2 + $0xb0] sm:$0xff]
  %v488 = vld [vmem:[%s2 + $0xb8] sm:$0xff]
  %v489 = vld [vmem:[%s2 + $0xc0] sm:$0xff]
  %v490 = vld [vmem:[%s2 + $0xc8] sm:$0xff]
  %v491 = vld [vmem:[%s2 + $0xd0] sm:$0xff]
  %v492 = vld [vmem:[%s3 + $0x3] sm:$0x1]
  %v493 = vlaneseq
  %v494 = vshrl.u32 %v493, 7
  %v495 = vsub.s32 0, %v494
  %v496 = vrot.slane %v492, %v495
  %v498 = vsel %vm163, %v481, 0
  %500 = vmatprep.subr.mxu0 0.0
  %501 = vmatpush1.msra.mxu0 %v484
  %502 = vmatprep.subr.mxu0 0.0
  %503 = vmatpush1.msra.mxu0 %v485
  %504 = vmatprep.subr.mxu0 0.0
  %505 = vmatpush1.msra.mxu0 %v486
  %506 = vmatprep.subr.mxu0 0.0
  %507 = vmatpush1.msra.mxu0 %v487
  %508 = vmatprep.subr.mxu0 0.0
  %509 = vmatpush1.msra.mxu0 %v488
  %510 = vmatprep.subr.mxu0 0.0
  %511 = vmatpush1.msra.mxu0 %v489
  %512 = vmatprep.subr.mxu0 0.0
  %513 = vmatpush1.msra.mxu0 %v490
  %514 = vmatprep.subr.mxu0 0.0
  %515 = vmatpush1.msra.mxu0 %v491
  %516 = vmatprep.subr.mxu0 0.0
  %517 = vmatpush1.msra.mxu0 0.0
  %518 = vmatprep.subr.mxu0 0.0
  %519 = vmatpush1.msra.mxu0 0.0
  %520 = vmatprep.subr.mxu0 0.0
  %521 = vmatpush1.msra.mxu0 0.0
  %522 = vmatprep.subr.mxu0 0.0
  %523 = vmatpush1.msra.mxu0 0.0
  %524 = vmatprep.subr.mxu0 0.0
  %525 = vmatpush1.msra.mxu0 0.0
  %526 = vmatprep.subr.mxu0 0.0
  %527 = vmatpush1.msra.mxu0 0.0
  %528 = vmatprep.subr.mxu0 0.0
  %529 = vmatpush1.msra.mxu0 0.0
  %530 = vmatprep.subr.mxu0 0.0
  %531 = vmatpush1.msra.mxu0 0.0
  %532 = vmatprep.subr.mxu0 0.0
  %533 = vmatpush1.msra.mxu0 0.0
  %534 = vmatprep.subr.mxu0 0.0
  %535 = vmatpush1.msra.mxu0 0.0
  %536 = vmatprep.subr.mxu0 0.0
  %537 = vmatpush1.msra.mxu0 0.0
  %538 = vmatprep.subr.mxu0 0.0
  %539 = vmatpush1.msra.mxu0 0.0
  %540 = vmatprep.subr.mxu0 0.0
  %541 = vmatpush1.msra.mxu0 0.0
  %542 = vmatprep.subr.mxu0 0.0
  %543 = vmatpush1.msra.mxu0 0.0
  %544 = vmatprep.subr.mxu0 0.0
  %545 = vmatpush1.msra.mxu0 0.0
  %546 = vmatprep.subr.mxu0 0.0
  %547 = vmatpush1.msra.mxu0 0.0
  %548 = vmatprep.subr.mxu0 0.0
  %549 = vmatpush1.msra.mxu0 0.0
  %550 = vmatprep.subr.mxu0 0.0
  %551 = vmatpush1.msra.mxu0 0.0
  %552 = vmatprep.subr.mxu0 0.0
  %553 = vmatpush1.msra.mxu0 0.0
  %554 = vmatprep.subr.mxu0 0.0
  %555 = vmatpush1.msra.mxu0 0.0
  %556 = vmatprep.subr.mxu0 0.0
  %557 = vmatpush1.msra.mxu0 0.0
  %558 = vmatprep.subr.mxu0 0.0
  %559 = vmatpush1.msra.mxu0 0.0
  %560 = vmatprep.subr.mxu0 0.0
  %561 = vmatpush1.msra.mxu0 0.0
  %562 = vmatprep.subr.mxu0 0.0
  %563 = vmatpush1.msra.mxu0 0.0
  %564 = vmatprep.mubr.f32.mxu0 0.0
  %565 = vmatmul.mubr.f32.gmra.mrb[0].mxu0 %v498
  %v566 = vpop.f32.mrb[0].mxu0
  %v567 = vadd.f32 %v496, %v566
  %v568 = vpop.f32.mrb[0].mxu0
  %569 = vdwg.mxu0
  %v570 = vmax.f32 %v567, 0.0
  %v571 = vld [vmem:[%s2 + $0xd8] sm:$0xff]
  %v572 = vld [vmem:[%s2 + $0xe0] sm:$0xff]
  %v573 = vld [vmem:[%s2 + $0xe8] sm:$0xff]
  %v574 = vld [vmem:[%s2 + $0xf0] sm:$0xff]
  %v575 = vld [vmem:[%s2 + $0xf8] sm:$0xff]
  %v576 = vld [vmem:[%s2 + $0x100] sm:$0xff]
  %v577 = vld [vmem:[%s2 + $0x108] sm:$0xff]
  %v578 = vld [vmem:[%s2 + $0x110] sm:$0xff]
  %v579 = vld [vmem:[%s3 + $0x4] sm:$0x1]
  %v580 = vlaneseq
  %v581 = vshrl.u32 %v580, 7
  %v582 = vsub.s32 0, %v581
  %v583 = vrot.slane %v579, %v582
  %v585 = vsel %vm163, %v570, 0
  %587 = vmatprep.subr.mxu0 0.0
  %588 = vmatpush1.msra.mxu0 %v571
  %589 = vmatprep.subr.mxu0 0.0
  %590 = vmatpush1.msra.mxu0 %v572
  %591 = vmatprep.subr.mxu0 0.0
  %592 = vmatpush1.msra.mxu0 %v573
  %593 = vmatprep.subr.mxu0 0.0
  %594 = vmatpush1.msra.mxu0 %v574
  %595 = vmatprep.subr.mxu0 0.0
  %596 = vmatpush1.msra.mxu0 %v575
  %597 = vmatprep.subr.mxu0 0.0
  %598 = vmatpush1.msra.mxu0 %v576
  %599 = vmatprep.subr.mxu0 0.0
  %600 = vmatpush1.msra.mxu0 %v577
  %601 = vmatprep.subr.mxu0 0.0
  %602 = vmatpush1.msra.mxu0 %v578
  %603 = vmatprep.subr.mxu0 0.0
  %604 = vmatpush1.msra.mxu0 0.0
  %605 = vmatprep.subr.mxu0 0.0
  %606 = vmatpush1.msra.mxu0 0.0
  %607 = vmatprep.subr.mxu0 0.0
  %608 = vmatpush1.msra.mxu0 0.0
  %609 = vmatprep.subr.mxu0 0.0
  %610 = vmatpush1.msra.mxu0 0.0
  %611 = vmatprep.subr.mxu0 0.0
  %612 = vmatpush1.msra.mxu0 0.0
  %613 = vmatprep.subr.mxu0 0.0
  %614 = vmatpush1.msra.mxu0 0.0
  %615 = vmatprep.subr.mxu0 0.0
  %616 = vmatpush1.msra.mxu0 0.0
  %617 = vmatprep.subr.mxu0 0.0
  %618 = vmatpush1.msra.mxu0 0.0
  %619 = vmatprep.subr.mxu0 0.0
  %620 = vmatpush1.msra.mxu0 0.0
  %621 = vmatprep.subr.mxu0 0.0
  %622 = vmatpush1.msra.mxu0 0.0
  %623 = vmatprep.subr.mxu0 0.0
  %624 = vmatpush1.msra.mxu0 0.0
  %625 = vmatprep.subr.mxu0 0.0
  %626 = vmatpush1.msra.mxu0 0.0
  %627 = vmatprep.subr.mxu0 0.0
  %628 = vmatpush1.msra.mxu0 0.0
  %629 = vmatprep.subr.mxu0 0.0
  %630 = vmatpush1.msra.mxu0 0.0
  %631 = vmatprep.subr.mxu0 0.0
  %632 = vmatpush1.msra.mxu0 0.0
  %633 = vmatprep.subr.mxu0 0.0
  %634 = vmatpush1.msra.mxu0 0.0
  %635 = vmatprep.subr.mxu0 0.0
  %636 = vmatpush1.msra.mxu0 0.0
  %637 = vmatprep.subr.mxu0 0.0
  %638 = vmatpush1.msra.mxu0 0.0
  %639 = vmatprep.subr.mxu0 0.0
  %640 = vmatpush1.msra.mxu0 0.0
  %641 = vmatprep.subr.mxu0 0.0
  %642 = vmatpush1.msra.mxu0 0.0
  %643 = vmatprep.subr.mxu0 0.0
  %644 = vmatpush1.msra.mxu0 0.0
  %645 = vmatprep.subr.mxu0 0.0
  %646 = vmatpush1.msra.mxu0 0.0
  %647 = vmatprep.subr.mxu0 0.0
  %648 = vmatpush1.msra.mxu0 0.0
  %649 = vmatprep.subr.mxu0 0.0
  %650 = vmatpush1.msra.mxu0 0.0
  %651 = vmatprep.mubr.f32.mxu0 0.0
  %652 = vmatmul.mubr.f32.gmra.mrb[0].mxu0 %v585
  %v653 = vpop.f32.mrb[0].mxu0
  %v654 = vadd.f32 %v583, %v653
  %v655 = vpop.f32.mrb[0].mxu0
  %656 = vdwg.mxu0
  %v657 = vmax.f32 %v654, 0.0
  %v658 = vld [vmem:[%s2 + $0x118] sm:$0xff]
  %v659 = vld [vmem:[%s2 + $0x120] sm:$0xff]
  %v660 = vld [vmem:[%s2 + $0x128] sm:$0xff]
  %v661 = vld [vmem:[%s2 + $0x130] sm:$0xff]
  %v662 = vld [vmem:[%s2 + $0x138] sm:$0xff]
  %v663 = vld [vmem:[%s2 + $0x140] sm:$0xff]
  %v664 = vld [vmem:[%s2 + $0x148] sm:$0xff]
  %v665 = vld [vmem:[%s2 + $0x150] sm:$0xff]
  %v666 = vld [vmem:[%s3 + $0x5] sm:$0x1]
  %v667 = vlaneseq
  %v668 = vshrl.u32 %v667, 7
  %v669 = vsub.s32 0, %v668
  %v670 = vrot.slane %v666, %v669
  %v672 = vsel %vm163, %v657, 0
  %674 = vmatprep.subr.mxu0 0.0
  %675 = vmatpush1.msra.mxu0 %v658
  %676 = vmatprep.subr.mxu0 0.0
  %677 = vmatpush1.msra.mxu0 %v659
  %678 = vmatprep.subr.mxu0 0.0
  %679 = vmatpush1.msra.mxu0 %v660
  %680 = vmatprep.subr.mxu0 0.0
  %681 = vmatpush1.msra.mxu0 %v661
  %682 = vmatprep.subr.mxu0 0.0
  %683 = vmatpush1.msra.mxu0 %v662
  %684 = vmatprep.subr.mxu0 0.0
  %685 = vmatpush1.msra.mxu0 %v663
  %686 = vmatprep.subr.mxu0 0.0
  %687 = vmatpush1.msra.mxu0 %v664
  %688 = vmatprep.subr.mxu0 0.0
  %689 = vmatpush1.msra.mxu0 %v665
  %690 = vmatprep.subr.mxu0 0.0
  %691 = vmatpush1.msra.mxu0 0.0
  %692 = vmatprep.subr.mxu0 0.0
  %693 = vmatpush1.msra.mxu0 0.0
  %694 = vmatprep.subr.mxu0 0.0
  %695 = vmatpush1.msra.mxu0 0.0
  %696 = vmatprep.subr.mxu0 0.0
  %697 = vmatpush1.msra.mxu0 0.0
  %698 = vmatprep.subr.mxu0 0.0
  %699 = vmatpush1.msra.mxu0 0.0
  %700 = vmatprep.subr.mxu0 0.0
  %701 = vmatpush1.msra.mxu0 0.0
  %702 = vmatprep.subr.mxu0 0.0
  %703 = vmatpush1.msra.mxu0 0.0
  %704 = vmatprep.subr.mxu0 0.0
  %705 = vmatpush1.msra.mxu0 0.0
  %706 = vmatprep.subr.mxu0 0.0
  %707 = vmatpush1.msra.mxu0 0.0
  %708 = vmatprep.subr.mxu0 0.0
  %709 = vmatpush1.msra.mxu0 0.0
  %710 = vmatprep.subr.mxu0 0.0
  %711 = vmatpush1.msra.mxu0 0.0
  %712 = vmatprep.subr.mxu0 0.0
  %713 = vmatpush1.msra.mxu0 0.0
  %714 = vmatprep.subr.mxu0 0.0
  %715 = vmatpush1.msra.mxu0 0.0
  %716 = vmatprep.subr.mxu0 0.0
  %717 = vmatpush1.msra.mxu0 0.0
  %718 = vmatprep.subr.mxu0 0.0
  %719 = vmatpush1.msra.mxu0 0.0
  %720 = vmatprep.subr.mxu0 0.0
  %721 = vmatpush1.msra.mxu0 0.0
  %722 = vmatprep.subr.mxu0 0.0
  %723 = vmatpush1.msra.mxu0 0.0
  %724 = vmatprep.subr.mxu0 0.0
  %725 = vmatpush1.msra.mxu0 0.0
  %726 = vmatprep.subr.mxu0 0.0
  %727 = vmatpush1.msra.mxu0 0.0
  %728 = vmatprep.subr.mxu0 0.0
  %729 = vmatpush1.msra.mxu0 0.0
  %730 = vmatprep.subr.mxu0 0.0
  %731 = vmatpush1.msra.mxu0 0.0
  %732 = vmatprep.subr.mxu0 0.0
  %733 = vmatpush1.msra.mxu0 0.0
  %734 = vmatprep.subr.mxu0 0.0
  %735 = vmatpush1.msra.mxu0 0.0
  %736 = vmatprep.subr.mxu0 0.0
  %737 = vmatpush1.msra.mxu0 0.0
  %738 = vmatprep.mubr.f32.mxu0 0.0
  %739 = vmatmul.mubr.f32.gmra.mrb[0].mxu0 %v672
  %v740 = vpop.f32.mrb[0].mxu0
  %v741 = vadd.f32 %v670, %v740
  %v742 = vpop.f32.mrb[0].mxu0
  %743 = vdwg.mxu0
  %v744 = vlaneseq
  %v745 = vand.u32 %v744, 127
  %vm746 = vcmp.lt.s32.totalorder %v745, 16
  %v747 = vxor.u32 %v741, 2147483648
  %v748 = vmul.f32 %v747, 1.442695
  %v749 = vpow.pop %v748
  %v750 = vadd.f32 %v749, 1.0
  %v751 = vrcp.pop %v750
  %v752 = vmul.f32 1.0, %v751
  %v753 = vmul.f32 %v752, 0.9
  %v754 = vadd.f32 %v753, 0.1
  %v755 = vsel %vm746, %v741, %v754
  %v756 = vld [vmem:[%s1] sm:$0x3]
  %758 = vrot.lane.b32.xlu0 %v756, 16
  %v759 = vpop.permute.xlu0 %758
  %v761 = vmul.f32 %v755, %v759
  %763 = vrot.lane.b32.xlu0 %v761, 112
  %v764 = vpop.permute.xlu0 %763
  %v766 = vadd.f32 %v755, %v764
  %v767 = vld [vmem:[%s2 + $0x238] sm:$0xff]
  %v768 = vld [vmem:[%s2 + $0x240] sm:$0xff]
  %v769 = vld [vmem:[%s2 + $0x248] sm:$0xff]
  %v770 = vld [vmem:[%s2 + $0x250] sm:$0xff]
  %v771 = vld [vmem:[%s2 + $0x168] sm:$0xff]
  %v772 = vld [vmem:[%s2 + $0x170] sm:$0xff]
  %v774 = vsel %vm30, %v766, 0
  %776 = vmatprep.subr.mxu0 0.0
  %777 = vmatpush1.msra.mxu0 %v771
  %778 = vmatprep.subr.mxu0 0.0
  %779 = vmatpush1.msra.mxu0 %v772
  %780 = vmatprep.subr.mxu0 0.0
  %781 = vmatpush1.msra.mxu0 0.0
  %782 = vmatprep.subr.mxu0 0.0
  %783 = vmatpush1.msra.mxu0 0.0
  %784 = vmatprep.subr.mxu0 0.0
  %785 = vmatpush1.msra.mxu0 0.0
  %786 = vmatprep.subr.mxu0 0.0
  %787 = vmatpush1.msra.mxu0 0.0
  %788 = vmatprep.subr.mxu0 0.0
  %789 = vmatpush1.msra.mxu0 0.0
  %790 = vmatprep.subr.mxu0 0.0
  %791 = vmatpush1.msra.mxu0 0.0
  %792 = vmatprep.subr.mxu0 0.0
  %793 = vmatpush1.msra.mxu0 0.0
  %794 = vmatprep.subr.mxu0 0.0
  %795 = vmatpush1.msra.mxu0 0.0
  %796 = vmatprep.subr.mxu0 0.0
  %797 = vmatpush1.msra.mxu0 0.0
  %798 = vmatprep.subr.mxu0 0.0
  %799 = vmatpush1.msra.mxu0 0.0
  %800 = vmatprep.subr.mxu0 0.0
  %801 = vmatpush1.msra.mxu0 0.0
  %802 = vmatprep.subr.mxu0 0.0
  %803 = vmatpush1.msra.mxu0 0.0
  %804 = vmatprep.subr.mxu0 0.0
  %805 = vmatpush1.msra.mxu0 0.0
  %806 = vmatprep.subr.mxu0 0.0
  %807 = vmatpush1.msra.mxu0 0.0
  %808 = vmatprep.subr.mxu0 0.0
  %809 = vmatpush1.msra.mxu0 0.0
  %810 = vmatprep.subr.mxu0 0.0
  %811 = vmatpush1.msra.mxu0 0.0
  %812 = vmatprep.subr.mxu0 0.0
  %813 = vmatpush1.msra.mxu0 0.0
  %814 = vmatprep.subr.mxu0 0.0
  %815 = vmatpush1.msra.mxu0 0.0
  %816 = vmatprep.subr.mxu0 0.0
  %817 = vmatpush1.msra.mxu0 0.0
  %818 = vmatprep.subr.mxu0 0.0
  %819 = vmatpush1.msra.mxu0 0.0
  %820 = vmatprep.subr.mxu0 0.0
  %821 = vmatpush1.msra.mxu0 0.0
  %822 = vmatprep.subr.mxu0 0.0
  %823 = vmatpush1.msra.mxu0 0.0
  %824 = vmatprep.subr.mxu0 0.0
  %825 = vmatpush1.msra.mxu0 0.0
  %826 = vmatprep.subr.mxu0 0.0
  %827 = vmatpush1.msra.mxu0 0.0
  %828 = vmatprep.subr.mxu0 0.0
  %829 = vmatpush1.msra.mxu0 0.0
  %830 = vmatprep.subr.mxu0 0.0
  %831 = vmatpush1.msra.mxu0 0.0
  %832 = vmatprep.subr.mxu0 0.0
  %833 = vmatpush1.msra.mxu0 0.0
  %834 = vmatprep.subr.mxu0 0.0
  %835 = vmatpush1.msra.mxu0 0.0
  %836 = vmatprep.subr.mxu0 0.0
  %837 = vmatpush1.msra.mxu0 0.0
  %838 = vmatprep.subr.mxu0 0.0
  %839 = vmatpush1.msra.mxu0 0.0
  %840 = vmatprep.mubr.f32.mxu0 0.0
  %841 = vmatmul.mubr.f32.gmra.mrb[0].mxu0 %v774
  %v842 = vpop.f32.mrb[0].mxu0
  %v843 = vadd.f32 0.0, %v842
  %v844 = vpop.f32.mrb[0].mxu0
  %845 = vdwg.mxu0
  %vm846 = vcmask 15360
  %v848 = vsel %vm846, %v767, 0
  %v851 = vsel %vm846, %v768, 0
  %v854 = vsel %vm846, %v769, 0
  %v857 = vsel %vm846, %v770, 0
  %vm859 = vcmask 1041408
  %v861 = vsel %vm859, %v843, 0
  %863 = vmatprep.subr.mxu0 0.0
  %864 = vmatpush1.msra.mxu0 %v861
  %865 = vmatprep.subr.mxu0 0.0
  %866 = vmatpush1.msra.mxu0 0.0
  %867 = vmatprep.subr.mxu0 0.0
  %868 = vmatpush1.msra.mxu0 0.0
  %869 = vmatprep.subr.mxu0 0.0
  %870 = vmatpush1.msra.mxu0 0.0
  %871 = vmatprep.subr.mxu0 0.0
  %872 = vmatpush1.msra.mxu0 0.0
  %873 = vmatprep.subr.mxu0 0.0
  %874 = vmatpush1.msra.mxu0 0.0
  %875 = vmatprep.subr.mxu0 0.0
  %876 = vmatpush1.msra.mxu0 0.0
  %877 = vmatprep.subr.mxu0 0.0
  %878 = vmatpush1.msra.mxu0 0.0
  %879 = vmatprep.subr.mxu0 0.0
  %880 = vmatpush1.msra.mxu0 0.0
  %881 = vmatprep.subr.mxu0 0.0
  %882 = vmatpush1.msra.mxu0 0.0
  %883 = vmatprep.subr.mxu0 0.0
  %884 = vmatpush1.msra.mxu0 0.0
  %885 = vmatprep.subr.mxu0 0.0
  %886 = vmatpush1.msra.mxu0 0.0
  %887 = vmatprep.subr.mxu0 0.0
  %888 = vmatpush1.msra.mxu0 0.0
  %889 = vmatprep.subr.mxu0 0.0
  %890 = vmatpush1.msra.mxu0 0.0
  %891 = vmatprep.subr.mxu0 0.0
  %892 = vmatpush1.msra.mxu0 0.0
  %893 = vmatprep.subr.mxu0 0.0
  %894 = vmatpush1.msra.mxu0 0.0
  %895 = vmatprep.subr.mxu0 0.0
  %896 = vmatpush1.msra.mxu0 0.0
  %897 = vmatprep.subr.mxu0 0.0
  %898 = vmatpush1.msra.mxu0 0.0
  %899 = vmatprep.subr.mxu0 0.0
  %900 = vmatpush1.msra.mxu0 0.0
  %901 = vmatprep.subr.mxu0 0.0
  %902 = vmatpush1.msra.mxu0 0.0
  %903 = vmatprep.subr.mxu0 0.0
  %904 = vmatpush1.msra.mxu0 0.0
  %905 = vmatprep.subr.mxu0 0.0
  %906 = vmatpush1.msra.mxu0 0.0
  %907 = vmatprep.subr.mxu0 0.0
  %908 = vmatpush1.msra.mxu0 0.0
  %909 = vmatprep.subr.mxu0 0.0
  %910 = vmatpush1.msra.mxu0 0.0
  %911 = vmatprep.subr.mxu0 0.0
  %912 = vmatpush1.msra.mxu0 0.0
  %913 = vmatprep.subr.mxu0 0.0
  %914 = vmatpush1.msra.mxu0 0.0
  %915 = vmatprep.subr.mxu0 0.0
  %916 = vmatpush1.msra.mxu0 0.0
  %917 = vmatprep.subr.mxu0 0.0
  %918 = vmatpush1.msra.mxu0 0.0
  %919 = vmatprep.subr.mxu0 0.0
  %920 = vmatpush1.msra.mxu0 0.0
  %921 = vmatprep.subr.mxu0 0.0
  %922 = vmatpush1.msra.mxu0 0.0
  %923 = vmatprep.subr.mxu0 0.0
  %924 = vmatpush1.msra.mxu0 0.0
  %925 = vmatprep.subr.mxu0 0.0
  %926 = vmatpush1.msra.mxu0 0.0
  %927 = vmatprep.mubr.f32.mxu0 0.0
  %928 = vmatmul.mubr.f32.gmra.mrb[0].mxu0 %v848
  %v929 = vpop.f32.mrb[0].mxu0
  %v930 = vadd.f32 0.0, %v929
  %v931 = vpop.f32.mrb[0].mxu0
  %932 = vmatprep.mubr.f32.mxu0 0.0
  %933 = vmatmul.mubr.f32.gmra.mrb[0].mxu0 %v851
  %v934 = vpop.f32.mrb[0].mxu0
  %v935 = vadd.f32 0.0, %v934
  %v936 = vpop.f32.mrb[0].mxu0
  %937 = vmatprep.mubr.f32.mxu0 0.0
  %938 = vmatmul.mubr.f32.gmra.mrb[0].mxu0 %v854
  %v939 = vpop.f32.mrb[0].mxu0
  %v940 = vadd.f32 0.0, %v939
  %v941 = vpop.f32.mrb[0].mxu0
  %942 = vmatprep.mubr.f32.mxu0 0.0
  %943 = vmatmul.mubr.f32.gmra.mrb[0].mxu0 %v857
  %v944 = vpop.f32.mrb[0].mxu0
  %v945 = vadd.f32 0.0, %v944
  %v946 = vpop.f32.mrb[0].mxu0
  %947 = vdwg.mxu0
  %v948 = vld [vmem:[%s0] sm:$0xff]
  %v949 = vld [vmem:[%s0 + $0x8] sm:$0xff]
  %v950 = vld [vmem:[%s0 + $0x10] sm:$0xff]
  %v951 = vld [vmem:[%s0 + $0x18] sm:$0xff]
  %v952 = vld [vmem:[%s2 + $0x158] sm:$0xff]
  %v953 = vld [vmem:[%s2 + $0x160] sm:$0xff]
  %v955 = vsel %vm30, %v948, 0
  %v958 = vsel %vm30, %v949, 0
  %v961 = vsel %vm30, %v950, 0
  %v964 = vsel %vm30, %v951, 0
  %966 = vmatprep.subr.mxu0 0.0
  %967 = vmatpush1.msra.mxu0 %v952
  %968 = vmatprep.subr.mxu0 0.0
  %969 = vmatpush1.msra.mxu0 %v953
  %970 = vmatprep.subr.mxu0 0.0
  %971 = vmatpush1.msra.mxu0 0.0
  %972 = vmatprep.subr.mxu0 0.0
  %973 = vmatpush1.msra.mxu0 0.0
  %974 = vmatprep.subr.mxu0 0.0
  %975 = vmatpush1.msra.mxu0 0.0
  %976 = vmatprep.subr.mxu0 0.0
  %977 = vmatpush1.msra.mxu0 0.0
  %978 = vmatprep.subr.mxu0 0.0
  %979 = vmatpush1.msra.mxu0 0.0
  %980 = vmatprep.subr.mxu0 0.0
  %981 = vmatpush1.msra.mxu0 0.0
  %982 = vmatprep.subr.mxu0 0.0
  %983 = vmatpush1.msra.mxu0 0.0
  %984 = vmatprep.subr.mxu0 0.0
  %985 = vmatpush1.msra.mxu0 0.0
  %986 = vmatprep.subr.mxu0 0.0
  %987 = vmatpush1.msra.mxu0 0.0
  %988 = vmatprep.subr.mxu0 0.0
  %989 = vmatpush1.msra.mxu0 0.0
  %990 = vmatprep.subr.mxu0 0.0
  %991 = vmatpush1.msra.mxu0 0.0
  %992 = vmatprep.subr.mxu0 0.0
  %993 = vmatpush1.msra.mxu0 0.0
  %994 = vmatprep.subr.mxu0 0.0
  %995 = vmatpush1.msra.mxu0 0.0
  %996 = vmatprep.subr.mxu0 0.0
  %997 = vmatpush1.msra.mxu0 0.0
  %998 = vmatprep.subr.mxu0 0.0
  %999 = vmatpush1.msra.mxu0 0.0
  %1000 = vmatprep.subr.mxu0 0.0
  %1001 = vmatpush1.msra.mxu0 0.0
  %1002 = vmatprep.subr.mxu0 0.0
  %1003 = vmatpush1.msra.mxu0 0.0
  %1004 = vmatprep.subr.mxu0 0.0
  %1005 = vmatpush1.msra.mxu0 0.0
  %1006 = vmatprep.subr.mxu0 0.0
  %1007 = vmatpush1.msra.mxu0 0.0
  %1008 = vmatprep.subr.mxu0 0.0
  %1009 = vmatpush1.msra.mxu0 0.0
  %1010 = vmatprep.subr.mxu0 0.0
  %1011 = vmatpush1.msra.mxu0 0.0
  %1012 = vmatprep.subr.mxu0 0.0
  %1013 = vmatpush1.msra.mxu0 0.0
  %1014 = vmatprep.subr.mxu0 0.0
  %1015 = vmatpush1.msra.mxu0 0.0
  %1016 = vmatprep.subr.mxu0 0.0
  %1017 = vmatpush1.msra.mxu0 0.0
  %1018 = vmatprep.subr.mxu0 0.0
  %1019 = vmatpush1.msra.mxu0 0.0
  %1020 = vmatprep.subr.mxu0 0.0
  %1021 = vmatpush1.msra.mxu0 0.0
  %1022 = vmatprep.subr.mxu0 0.0
  %1023 = vmatpush1.msra.mxu0 0.0
  %1024 = vmatprep.subr.mxu0 0.0
  %1025 = vmatpush1.msra.mxu0 0.0
  %1026 = vmatprep.subr.mxu0 0.0
  %1027 = vmatpush1.msra.mxu0 0.0
  %1028 = vmatprep.subr.mxu0 0.0
  %1029 = vmatpush1.msra.mxu0 0.0
  %1030 = vmatprep.mubr.f32.mxu0 0.0
  %1031 = vmatmul.mubr.f32.gmra.mrb[0].mxu0 %v955
  %v1032 = vpop.f32.mrb[0].mxu0
  %v1033 = vadd.f32 %v930, %v1032
  %v1034 = vpop.f32.mrb[0].mxu0
  %1035 = vmatprep.mubr.f32.mxu0 0.0
  %1036 = vmatmul.mubr.f32.gmra.mrb[0].mxu0 %v958
  %v1037 = vpop.f32.mrb[0].mxu0
  %v1038 = vadd.f32 %v935, %v1037
  %v1039 = vpop.f32.mrb[0].mxu0
  %1040 = vmatprep.mubr.f32.mxu0 0.0
  %1041 = vmatmul.mubr.f32.gmra.mrb[0].mxu0 %v961
  %v1042 = vpop.f32.mrb[0].mxu0
  %v1043 = vadd.f32 %v940, %v1042
  %v1044 = vpop.f32.mrb[0].mxu0
  %1045 = vmatprep.mubr.f32.mxu0 0.0
  %1046 = vmatmul.mubr.f32.gmra.mrb[0].mxu0 %v964
  %v1047 = vpop.f32.mrb[0].mxu0
  %v1048 = vadd.f32 %v945, %v1047
  %v1049 = vpop.f32.mrb[0].mxu0
  %1050 = vdwg.mxu0
  %v1051 = vld [vmem:[%s3 + $0x6] sm:$0x1]
  %v1052 = vlaneseq
  %v1053 = vshrl.u32 %v1052, 7
  %v1054 = vsub.s32 0, %v1053
  %v1055 = vrot.slane %v1051, %v1054
  %v1056 = vadd.f32 %v1033, %v1055
  %v1057 = vadd.f32 %v1038, %v1055
  %v1058 = vadd.f32 %v1043, %v1055
  %v1059 = vadd.f32 %v1048, %v1055
  %v1060 = vmax.f32 %v1056, 0.0
  %v1061 = vmax.f32 %v1057, 0.0
  %v1062 = vmax.f32 %v1058, 0.0
  %v1063 = vmax.f32 %v1059, 0.0
  %v1064 = vld [vmem:[%s2 + $0x178] sm:$0xff]
  %v1065 = vld [vmem:[%s2 + $0x180] sm:$0xff]
  %v1066 = vld [vmem:[%s2 + $0x188] sm:$0xff]
  %v1067 = vld [vmem:[%s2 + $0x190] sm:$0xff]
  %v1068 = vld [vmem:[%s2 + $0x198] sm:$0xff]
  %v1069 = vld [vmem:[%s2 + $0x1a0] sm:$0xff]
  %v1070 = vld [vmem:[%s2 + $0x1a8] sm:$0xff]
  %v1071 = vld [vmem:[%s2 + $0x1b0] sm:$0xff]
  %v1072 = vld [vmem:[%s3 + $0x7] sm:$0x1]
  %v1073 = vlaneseq
  %v1074 = vshrl.u32 %v1073, 7
  %v1075 = vsub.s32 0, %v1074
  %v1076 = vrot.slane %v1072, %v1075
  %v1078 = vsel %vm163, %v1060, 0
  %v1081 = vsel %vm163, %v1061, 0
  %v1084 = vsel %vm163, %v1062, 0
  %v1087 = vsel %vm163, %v1063, 0
  %1089 = vmatprep.subr.mxu0 0.0
  %1090 = vmatpush1.msra.mxu0 %v1064
  %1091 = vmatprep.subr.mxu0 0.0
  %1092 = vmatpush1.msra.mxu0 %v1065
  %1093 = vmatprep.subr.mxu0 0.0
  %1094 = vmatpush1.msra.mxu0 %v1066
  %1095 = vmatprep.subr.mxu0 0.0
  %1096 = vmatpush1.msra.mxu0 %v1067
  %1097 = vmatprep.subr.mxu0 0.0
  %1098 = vmatpush1.msra.mxu0 %v1068
  %1099 = vmatprep.subr.mxu0 0.0
  %1100 = vmatpush1.msra.mxu0 %v1069
  %1101 = vmatprep.subr.mxu0 0.0
  %1102 = vmatpush1.msra.mxu0 %v1070
  %1103 = vmatprep.subr.mxu0 0.0
  %1104 = vmatpush1.msra.mxu0 %v1071
  %1105 = vmatprep.subr.mxu0 0.0
  %1106 = vmatpush1.msra.mxu0 0.0
  %1107 = vmatprep.subr.mxu0 0.0
  %1108 = vmatpush1.msra.mxu0 0.0
  %1109 = vmatprep.subr.mxu0 0.0
  %1110 = vmatpush1.msra.mxu0 0.0
  %1111 = vmatprep.subr.mxu0 0.0
  %1112 = vmatpush1.msra.mxu0 0.0
  %1113 = vmatprep.subr.mxu0 0.0
  %1114 = vmatpush1.msra.mxu0 0.0
  %1115 = vmatprep.subr.mxu0 0.0
  %1116 = vmatpush1.msra.mxu0 0.0
  %1117 = vmatprep.subr.mxu0 0.0
  %1118 = vmatpush1.msra.mxu0 0.0
  %1119 = vmatprep.subr.mxu0 0.0
  %1120 = vmatpush1.msra.mxu0 0.0
  %1121 = vmatprep.subr.mxu0 0.0
  %1122 = vmatpush1.msra.mxu0 0.0
  %1123 = vmatprep.subr.mxu0 0.0
  %1124 = vmatpush1.msra.mxu0 0.0
  %1125 = vmatprep.subr.mxu0 0.0
  %1126 = vmatpush1.msra.mxu0 0.0
  %1127 = vmatprep.subr.mxu0 0.0
  %1128 = vmatpush1.msra.mxu0 0.0
  %1129 = vmatprep.subr.mxu0 0.0
  %1130 = vmatpush1.msra.mxu0 0.0
  %1131 = vmatprep.subr.mxu0 0.0
  %1132 = vmatpush1.msra.mxu0 0.0
  %1133 = vmatprep.subr.mxu0 0.0
  %1134 = vmatpush1.msra.mxu0 0.0
  %1135 = vmatprep.subr.mxu0 0.0
  %1136 = vmatpush1.msra.mxu0 0.0
  %1137 = vmatprep.subr.mxu0 0.0
  %1138 = vmatpush1.msra.mxu0 0.0
  %1139 = vmatprep.subr.mxu0 0.0
  %1140 = vmatpush1.msra.mxu0 0.0
  %1141 = vmatprep.subr.mxu0 0.0
  %1142 = vmatpush1.msra.mxu0 0.0
  %1143 = vmatprep.subr.mxu0 0.0
  %1144 = vmatpush1.msra.mxu0 0.0
  %1145 = vmatprep.subr.mxu0 0.0
  %1146 = vmatpush1.msra.mxu0 0.0
  %1147 = vmatprep.subr.mxu0 0.0
  %1148 = vmatpush1.msra.mxu0 0.0
  %1149 = vmatprep.subr.mxu0 0.0
  %1150 = vmatpush1.msra.mxu0 0.0
  %1151 = vmatprep.subr.mxu0 0.0
  %1152 = vmatpush1.msra.mxu0 0.0
  %1153 = vmatprep.mubr.f32.mxu0 0.0
  %1154 = vmatmul.mubr.f32.gmra.mrb[0].mxu0 %v1078
  %v1155 = vpop.f32.mrb[0].mxu0
  %v1156 = vadd.f32 %v1076, %v1155
  %v1157 = vpop.f32.mrb[0].mxu0
  %1158 = vmatprep.mubr.f32.mxu0 0.0
  %1159 = vmatmul.mubr.f32.gmra.mrb[0].mxu0 %v1081
  %v1160 = vpop.f32.mrb[0].mxu0
  %v1161 = vadd.f32 %v1076, %v1160
  %v1162 = vpop.f32.mrb[0].mxu0
  %1163 = vmatprep.mubr.f32.mxu0 0.0
  %1164 = vmatmul.mubr.f32.gmra.mrb[0].mxu0 %v1084
  %v1165 = vpop.f32.mrb[0].mxu0
  %v1166 = vadd.f32 %v1076, %v1165
  %v1167 = vpop.f32.mrb[0].mxu0
  %1168 = vmatprep.mubr.f32.mxu0 0.0
  %1169 = vmatmul.mubr.f32.gmra.mrb[0].mxu0 %v1087
  %v1170 = vpop.f32.mrb[0].mxu0
  %v1171 = vadd.f32 %v1076, %v1170
  %v1172 = vpop.f32.mrb[0].mxu0
  %1173 = vdwg.mxu0
  %v1174 = vmax.f32 %v1156, 0.0
  %v1175 = vmax.f32 %v1161, 0.0
  %v1176 = vmax.f32 %v1166, 0.0
  %v1177 = vmax.f32 %v1171, 0.0
  %v1178 = vld [vmem:[%s2 + $0x1b8] sm:$0xff]
  %v1179 = vld [vmem:[%s2 + $0x1c0] sm:$0xff]
  %v1180 = vld [vmem:[%s2 + $0x1c8] sm:$0xff]
  %v1181 = vld [vmem:[%s2 + $0x1d0] sm:$0xff]
  %v1182 = vld [vmem:[%s2 + $0x1d8] sm:$0xff]
  %v1183 = vld [vmem:[%s2 + $0x1e0] sm:$0xff]
  %v1184 = vld [vmem:[%s2 + $0x1e8] sm:$0xff]
  %v1185 = vld [vmem:[%s2 + $0x1f0] sm:$0xff]
  %v1186 = vld [vmem:[%s3 + $0x8] sm:$0x1]
  %v1187 = vlaneseq
  %v1188 = vshrl.u32 %v1187, 7
  %v1189 = vsub.s32 0, %v1188
  %v1190 = vrot.slane %v1186, %v1189
  %v1192 = vsel %vm163, %v1174, 0
  %v1195 = vsel %vm163, %v1175, 0
  %v1198 = vsel %vm163, %v1176, 0
  %v1201 = vsel %vm163, %v1177, 0
  %1203 = vmatprep.subr.mxu0 0.0
  %1204 = vmatpush1.msra.mxu0 %v1178
  %1205 = vmatprep.subr.mxu0 0.0
  %1206 = vmatpush1.msra.mxu0 %v1179
  %1207 = vmatprep.subr.mxu0 0.0
  %1208 = vmatpush1.msra.mxu0 %v1180
  %1209 = vmatprep.subr.mxu0 0.0
  %1210 = vmatpush1.msra.mxu0 %v1181
  %1211 = vmatprep.subr.mxu0 0.0
  %1212 = vmatpush1.msra.mxu0 %v1182
  %1213 = vmatprep.subr.mxu0 0.0
  %1214 = vmatpush1.msra.mxu0 %v1183
  %1215 = vmatprep.subr.mxu0 0.0
  %1216 = vmatpush1.msra.mxu0 %v1184
  %1217 = vmatprep.subr.mxu0 0.0
  %1218 = vmatpush1.msra.mxu0 %v1185
  %1219 = vmatprep.subr.mxu0 0.0
  %1220 = vmatpush1.msra.mxu0 0.0
  %1221 = vmatprep.subr.mxu0 0.0
  %1222 = vmatpush1.msra.mxu0 0.0
  %1223 = vmatprep.subr.mxu0 0.0
  %1224 = vmatpush1.msra.mxu0 0.0
  %1225 = vmatprep.subr.mxu0 0.0
  %1226 = vmatpush1.msra.mxu0 0.0
  %1227 = vmatprep.subr.mxu0 0.0
  %1228 = vmatpush1.msra.mxu0 0.0
  %1229 = vmatprep.subr.mxu0 0.0
  %1230 = vmatpush1.msra.mxu0 0.0
  %1231 = vmatprep.subr.mxu0 0.0
  %1232 = vmatpush1.msra.mxu0 0.0
  %1233 = vmatprep.subr.mxu0 0.0
  %1234 = vmatpush1.msra.mxu0 0.0
  %1235 = vmatprep.subr.mxu0 0.0
  %1236 = vmatpush1.msra.mxu0 0.0
  %1237 = vmatprep.subr.mxu0 0.0
  %1238 = vmatpush1.msra.mxu0 0.0
  %1239 = vmatprep.subr.mxu0 0.0
  %1240 = vmatpush1.msra.mxu0 0.0
  %1241 = vmatprep.subr.mxu0 0.0
  %1242 = vmatpush1.msra.mxu0 0.0
  %1243 = vmatprep.subr.mxu0 0.0
  %1244 = vmatpush1.msra.mxu0 0.0
  %1245 = vmatprep.subr.mxu0 0.0
  %1246 = vmatpush1.msra.mxu0 0.0
  %1247 = vmatprep.subr.mxu0 0.0
  %1248 = vmatpush1.msra.mxu0 0.0
  %1249 = vmatprep.subr.mxu0 0.0
  %1250 = vmatpush1.msra.mxu0 0.0
  %1251 = vmatprep.subr.mxu0 0.0
  %1252 = vmatpush1.msra.mxu0 0.0
  %1253 = vmatprep.subr.mxu0 0.0
  %1254 = vmatpush1.msra.mxu0 0.0
  %1255 = vmatprep.subr.mxu0 0.0
  %1256 = vmatpush1.msra.mxu0 0.0
  %1257 = vmatprep.subr.mxu0 0.0
  %1258 = vmatpush1.msra.mxu0 0.0
  %1259 = vmatprep.subr.mxu0 0.0
  %1260 = vmatpush1.msra.mxu0 0.0
  %1261 = vmatprep.subr.mxu0 0.0
  %1262 = vmatpush1.msra.mxu0 0.0
  %1263 = vmatprep.subr.mxu0 0.0
  %1264 = vmatpush1.msra.mxu0 0.0
  %1265 = vmatprep.subr.mxu0 0.0
  %1266 = vmatpush1.msra.mxu0 0.0
  %1267 = vmatprep.mubr.f32.mxu0 0.0
  %1268 = vmatmul.mubr.f32.gmra.mrb[0].mxu0 %v1192
  %v1269 = vpop.f32.mrb[0].mxu0
  %v1270 = vadd.f32 %v1190, %v1269
  %v1271 = vpop.f32.mrb[0].mxu0
  %1272 = vmatprep.mubr.f32.mxu0 0.0
  %1273 = vmatmul.mubr.f32.gmra.mrb[0].mxu0 %v1195
  %v1274 = vpop.f32.mrb[0].mxu0
  %v1275 = vadd.f32 %v1190, %v1274
  %v1276 = vpop.f32.mrb[0].mxu0
  %1277 = vmatprep.mubr.f32.mxu0 0.0
  %1278 = vmatmul.mubr.f32.gmra.mrb[0].mxu0 %v1198
  %v1279 = vpop.f32.mrb[0].mxu0
  %v1280 = vadd.f32 %v1190, %v1279
  %v1281 = vpop.f32.mrb[0].mxu0
  %1282 = vmatprep.mubr.f32.mxu0 0.0
  %1283 = vmatmul.mubr.f32.gmra.mrb[0].mxu0 %v1201
  %v1284 = vpop.f32.mrb[0].mxu0
  %v1285 = vadd.f32 %v1190, %v1284
  %v1286 = vpop.f32.mrb[0].mxu0
  %1287 = vdwg.mxu0
  %v1288 = vmax.f32 %v1270, 0.0
  %v1289 = vmax.f32 %v1275, 0.0
  %v1290 = vmax.f32 %v1280, 0.0
  %v1291 = vmax.f32 %v1285, 0.0
  %v1292 = vld [vmem:[%s2 + $0x1f8] sm:$0xff]
  %v1293 = vld [vmem:[%s2 + $0x200] sm:$0xff]
  %v1294 = vld [vmem:[%s2 + $0x208] sm:$0xff]
  %v1295 = vld [vmem:[%s2 + $0x210] sm:$0xff]
  %v1296 = vld [vmem:[%s2 + $0x218] sm:$0xff]
  %v1297 = vld [vmem:[%s2 + $0x220] sm:$0xff]
  %v1298 = vld [vmem:[%s2 + $0x228] sm:$0xff]
  %v1299 = vld [vmem:[%s2 + $0x230] sm:$0xff]
  %v1300 = vld [vmem:[%s3 + $0x9] sm:$0x1]
  %v1301 = vlaneseq
  %v1302 = vshrl.u32 %v1301, 7
  %v1303 = vsub.s32 0, %v1302
  %v1304 = vrot.slane %v1300, %v1303
  %v1306 = vsel %vm163, %v1288, 0
  %v1309 = vsel %vm163, %v1289, 0
  %v1312 = vsel %vm163, %v1290, 0
  %v1315 = vsel %vm163, %v1291, 0
  %1317 = vmatprep.subr.mxu0 0.0
  %1318 = vmatpush1.msra.mxu0 %v1292
  %1319 = vmatprep.subr.mxu0 0.0
  %1320 = vmatpush1.msra.mxu0 %v1293
  %1321 = vmatprep.subr.mxu0 0.0
  %1322 = vmatpush1.msra.mxu0 %v1294
  %1323 = vmatprep.subr.mxu0 0.0
  %1324 = vmatpush1.msra.mxu0 %v1295
  %1325 = vmatprep.subr.mxu0 0.0
  %1326 = vmatpush1.msra.mxu0 %v1296
  %1327 = vmatprep.subr.mxu0 0.0
  %1328 = vmatpush1.msra.mxu0 %v1297
  %1329 = vmatprep.subr.mxu0 0.0
  %1330 = vmatpush1.msra.mxu0 %v1298
  %1331 = vmatprep.subr.mxu0 0.0
  %1332 = vmatpush1.msra.mxu0 %v1299
  %1333 = vmatprep.subr.mxu0 0.0
  %1334 = vmatpush1.msra.mxu0 0.0
  %1335 = vmatprep.subr.mxu0 0.0
  %1336 = vmatpush1.msra.mxu0 0.0
  %1337 = vmatprep.subr.mxu0 0.0
  %1338 = vmatpush1.msra.mxu0 0.0
  %1339 = vmatprep.subr.mxu0 0.0
  %1340 = vmatpush1.msra.mxu0 0.0
  %1341 = vmatprep.subr.mxu0 0.0
  %1342 = vmatpush1.msra.mxu0 0.0
  %1343 = vmatprep.subr.mxu0 0.0
  %1344 = vmatpush1.msra.mxu0 0.0
  %1345 = vmatprep.subr.mxu0 0.0
  %1346 = vmatpush1.msra.mxu0 0.0
  %1347 = vmatprep.subr.mxu0 0.0
  %1348 = vmatpush1.msra.mxu0 0.0
  %1349 = vmatprep.subr.mxu0 0.0
  %1350 = vmatpush1.msra.mxu0 0.0
  %1351 = vmatprep.subr.mxu0 0.0
  %1352 = vmatpush1.msra.mxu0 0.0
  %1353 = vmatprep.subr.mxu0 0.0
  %1354 = vmatpush1.msra.mxu0 0.0
  %1355 = vmatprep.subr.mxu0 0.0
  %1356 = vmatpush1.msra.mxu0 0.0
  %1357 = vmatprep.subr.mxu0 0.0
  %1358 = vmatpush1.msra.mxu0 0.0
  %1359 = vmatprep.subr.mxu0 0.0
  %1360 = vmatpush1.msra.mxu0 0.0
  %1361 = vmatprep.subr.mxu0 0.0
  %1362 = vmatpush1.msra.mxu0 0.0
  %1363 = vmatprep.subr.mxu0 0.0
  %1364 = vmatpush1.msra.mxu0 0.0
  %1365 = vmatprep.subr.mxu0 0.0
  %1366 = vmatpush1.msra.mxu0 0.0
  %1367 = vmatprep.subr.mxu0 0.0
  %1368 = vmatpush1.msra.mxu0 0.0
  %1369 = vmatprep.subr.mxu0 0.0
  %1370 = vmatpush1.msra.mxu0 0.0
  %1371 = vmatprep.subr.mxu0 0.0
  %1372 = vmatpush1.msra.mxu0 0.0
  %1373 = vmatprep.subr.mxu0 0.0
  %1374 = vmatpush1.msra.mxu0 0.0
  %1375 = vmatprep.subr.mxu0 0.0
  %1376 = vmatpush1.msra.mxu0 0.0
  %1377 = vmatprep.subr.mxu0 0.0
  %1378 = vmatpush1.msra.mxu0 0.0
  %1379 = vmatprep.subr.mxu0 0.0
  %1380 = vmatpush1.msra.mxu0 0.0
  %1381 = vmatprep.mubr.f32.mxu0 0.0
  %1382 = vmatmul.mubr.f32.gmra.mrb[0].mxu0 %v1306
  %v1383 = vpop.f32.mrb[0].mxu0
  %v1384 = vadd.f32 %v1304, %v1383
  %v1385 = vpop.f32.mrb[0].mxu0
  %1386 = vmatprep.mubr.f32.mxu0 0.0
  %1387 = vmatmul.mubr.f32.gmra.mrb[0].mxu0 %v1309
  %v1388 = vpop.f32.mrb[0].mxu0
  %v1389 = vadd.f32 %v1304, %v1388
  %v1390 = vpop.f32.mrb[0].mxu0
  %1391 = vmatprep.mubr.f32.mxu0 0.0
  %1392 = vmatmul.mubr.f32.gmra.mrb[0].mxu0 %v1312
  %v1393 = vpop.f32.mrb[0].mxu0
  %v1394 = vadd.f32 %v1304, %v1393
  %v1395 = vpop.f32.mrb[0].mxu0
  %1396 = vmatprep.mubr.f32.mxu0 0.0
  %1397 = vmatmul.mubr.f32.gmra.mrb[0].mxu0 %v1315
  %v1398 = vpop.f32.mrb[0].mxu0
  %v1399 = vadd.f32 %v1304, %v1398
  %v1400 = vpop.f32.mrb[0].mxu0
  %1401 = vdwg.mxu0
  %vm1402 = vcmp.lt.s32.totalorder %v745, 2
  %v1403 = vmax.f32 %v1384, 0.0
  %v1404 = vmax.f32 %v1389, 0.0
  %v1405 = vmax.f32 %v1394, 0.0
  %v1406 = vmax.f32 %v1399, 0.0
  %vm1407 = vcmp.ne.f32.partialorder %v1384, %v1384
  %vm1408 = vcmp.ne.f32.partialorder %v1389, %v1389
  %vm1409 = vcmp.ne.f32.partialorder %v1394, %v1394
  %vm1410 = vcmp.ne.f32.partialorder %v1399, %v1399
  %v1411 = vadd.f32 %v1384, 0.0
  %v1412 = vadd.f32 %v1389, 0.0
  %v1413 = vadd.f32 %v1394, 0.0
  %v1414 = vadd.f32 %v1399, 0.0
  %v1415 = vand.u32 2147483647, %v1384
  %v1416 = vand.u32 2147483647, %v1389
  %v1417 = vand.u32 2147483647, %v1394
  %v1418 = vand.u32 2147483647, %v1399
  %v1419 = vsub.f32 0.0, %v1415
  %v1420 = vsub.f32 0.0, %v1416
  %v1421 = vsub.f32 0.0, %v1417
  %v1422 = vsub.f32 0.0, %v1418
  %v1423 = vmul.f32 %v1419, 1.442695
  %v1424 = vpow.pop %v1423
  %v1425 = vmul.f32 %v1420, 1.442695
  %v1426 = vpow.pop %v1425
  %v1427 = vmul.f32 %v1421, 1.442695
  %v1428 = vpow.pop %v1427
  %v1429 = vmul.f32 %v1422, 1.442695
  %v1430 = vpow.pop %v1429
  %v1431 = vadd.f32 %v1424, 1.0
  %v1432 = vlog2.pop %v1431
  %v1433 = vmul.f32 %v1432, 0.6931472
  %v1434 = vmul.f32 -0.5, %v1424
  %v1435 = vadd.f32 %v1434, 1.0
  %v1436 = vmul.f32 %v1435, %v1424
  %v1437 = vand.u32 2147483647, %v1424
  %vm1438 = vcmp.lt.f32.partialorder %v1437, 0.0004427343
  %v1439 = vsel %vm1438, %v1436, %v1433
  %v1440 = vadd.f32 %v1426, 1.0
  %v1441 = vlog2.pop %v1440
  %v1442 = vmul.f32 %v1441, 0.6931472
  %v1443 = vmul.f32 -0.5, %v1426
  %v1444 = vadd.f32 %v1443, 1.0
  %v1445 = vmul.f32 %v1444, %v1426
  %v1446 = vand.u32 2147483647, %v1426
  %vm1447 = vcmp.lt.f32.partialorder %v1446, 0.0004427343
  %v1448 = vsel %vm1447, %v1445, %v1442
  %v1449 = vadd.f32 %v1428, 1.0
  %v1450 = vlog2.pop %v1449
  %v1451 = vmul.f32 %v1450, 0.6931472
  %v1452 = vmul.f32 -0.5, %v1428
  %v1453 = vadd.f32 %v1452, 1.0
  %v1454 = vmul.f32 %v1453, %v1428
  %v1455 = vand.u32 2147483647, %v1428
  %vm1456 = vcmp.lt.f32.partialorder %v1455, 0.0004427343
  %v1457 = vsel %vm1456, %v1454, %v1451
  %v1458 = vadd.f32 %v1430, 1.0
  %v1459 = vlog2.pop %v1458
  %v1460 = vmul.f32 %v1459, 0.6931472
  %v1461 = vmul.f32 -0.5, %v1430
  %v1462 = vadd.f32 %v1461, 1.0
  %v1463 = vmul.f32 %v1462, %v1430
  %v1464 = vand.u32 2147483647, %v1430
  %vm1465 = vcmp.lt.f32.partialorder %v1464, 0.0004427343
  %v1466 = vsel %vm1465, %v1463, %v1460
  %v1467 = vadd.f32 %v1403, %v1439
  %v1468 = vadd.f32 %v1404, %v1448
  %v1469 = vadd.f32 %v1405, %v1457
  %v1470 = vadd.f32 %v1406, %v1466
  %v1471 = vsel %vm1407, %v1411, %v1467
  %v1472 = vsel %vm1408, %v1412, %v1468
  %v1473 = vsel %vm1409, %v1413, %v1469
  %v1474 = vsel %vm1410, %v1414, %v1470
  %v1475 = vmul.f32 %v1471, 0.9
  %v1476 = vmul.f32 %v1472, 0.9
  %v1477 = vmul.f32 %v1473, 0.9
  %v1478 = vmul.f32 %v1474, 0.9
  %v1479 = vadd.f32 %v1475, 0.1
  %v1480 = vadd.f32 %v1476, 0.1
  %v1481 = vadd.f32 %v1477, 0.1
  %v1482 = vadd.f32 %v1478, 0.1
  %v1483 = vsel %vm1402, %v1384, %v1479
  %v1484 = vsel %vm1402, %v1389, %v1480
  %v1485 = vsel %vm1402, %v1394, %v1481
  %v1486 = vsel %vm1402, %v1399, %v1482
  %1487 = vst.msk [vmem:[%s4] sm:$0xff] %vm163, %v755
  %1488 = vst.msk [vmem:[%s4 + $0x8] sm:$0xff] %vm163, %v1483
  %1489 = vst.msk [vmem:[%s4 + $0x10] sm:$0xff] %vm163, %v1484
  %1490 = vst.msk [vmem:[%s4 + $0x18] sm:$0xff] %vm163, %v1485
  %1491 = vst.msk [vmem:[%s4 + $0x20] sm:$0xff] %vm163, %v1486
  // Predicated region
  $region18: #{neural_process_forward.1} parent=0 // pred_check
    _
  $region19: #{neural_process_forward.1} parent=0 // pred_check_branch
    %1493 = sbr.rel (0) target = $region21
  $region20: #{neural_process_forward.1} parent=0 // pred_region
    _
  $region21: #{neural_process_forward.1} parent=0 // pred_fallthru
    _
  // Predicated region
  $region22: #{neural_process_forward.1} parent=0 // pred_check
    _
  $region23: #{neural_process_forward.1} parent=0 // pred_check_branch
    %1495 = sbr.rel (0) target = $region25
  $region24: #{neural_process_forward.1} parent=0 // pred_region
    _
  $region25: #{neural_process_forward.1} parent=0 // pred_fallthru
    _

</llo_original>
